<compile_context>
chip_gen: v7x
topology: tpu7x:2x2x1
jax: 0.10.0
libtpu: 0.0.40
codegen_flags: <defaults>
</compile_context>

<pallas_src>
import functools

import jax
import jax.numpy as jnp
from jax import lax
from jax.experimental import pallas as pl
from jax.experimental.pallas import tpu as pltpu

_MIB = 1024 * 1024


def _round_up(x: int, mult: int) -> int:
    return ((x + mult - 1) // mult) * mult


def _vmem_capacity_bytes() -> int:
    """Best-effort VMEM capacity query; conservative (v7x-sized) default."""
    try:
        info = pltpu.get_tpu_info()
        for attr in ("vmem_capacity_bytes", "vmem_size_bytes", "vmem_bytes"):
            val = getattr(info, attr, None)
            if isinstance(val, int) and val > 0:
                return val
    except Exception:
        pass
    try:
        kind = jax.devices()[0].device_kind.lower()
        if "v5 lite" in kind or "v5e" in kind or "v6" in kind:
            return 128 * _MIB
    except Exception:
        pass
    return 64 * _MIB


# --------------------------------------------------------------------------- #
# Kernels
# --------------------------------------------------------------------------- #
def _strided_copy_kernel(x_ref, o_ref, *, start, size, stride):
    # Pure gather: out[:, j] = x[:, start + j*stride].  No compute units used;
    # the kernel is a strided lane read + contiguous store.
    o_ref[...] = x_ref[:, pl.ds(start, size, stride=stride)]


def _onehot_matmul_kernel(x_ref, o_ref, *, seg_start, seg_w, wo, m, cx):
    # Fallback lane compaction via a one-hot selector matmul (selector built
    # on-chip from iota; nothing but the image crosses HBM).
    rows = x_ref[:, seg_start:seg_start + seg_w]
    if rows.dtype == jnp.bfloat16:
        # bf16 x exact-{0,1} selector with f32 accumulation is exact in 1 pass.
        sel_dtype, precision = jnp.bfloat16, lax.Precision.DEFAULT
    else:
        # f32 pass-through needs the full bf16x3 x bf16x3 decomposition.
        rows = rows.astype(jnp.float32)
        sel_dtype, precision = jnp.float32, lax.Precision.HIGHEST

    w_idx = lax.broadcasted_iota(jnp.int32, (seg_w, wo), 0)
    j_idx = lax.broadcasted_iota(jnp.int32, (seg_w, wo), 1)
    sel = (w_idx == j_idx * m + cx).astype(sel_dtype)

    out = jnp.dot(rows, sel, preferred_element_type=jnp.float32,
                  precision=precision)
    o_ref[...] = out.astype(o_ref.dtype)


# --------------------------------------------------------------------------- #
# One-time capability probes (tiny pallas_calls, cached per configuration).
# --------------------------------------------------------------------------- #
@functools.lru_cache(maxsize=None)
def _strided_lane_read_ok(block_w, start, size, stride, dtype) -> bool:
    try:
        base = (jnp.arange(8 * block_w, dtype=jnp.int32) % 241).astype(jnp.float32)
        x = base.reshape(8, block_w).astype(dtype)
        fn = pl.pallas_call(
            functools.partial(_strided_copy_kernel, start=start, size=size,
                              stride=stride),
            out_shape=jax.ShapeDtypeStruct((8, size), dtype),
            grid=(1,),
            in_specs=[pl.BlockSpec((8, block_w), lambda t: (0, 0))],
            out_specs=pl.BlockSpec((8, size), lambda t: (0, 0)),
        )
        got = jax.block_until_ready(fn(x))
        want = x[:, start:start + (size - 1) * stride + 1:stride]
        return bool(jnp.array_equal(got, want))
    except Exception:
        return False


@functools.lru_cache(maxsize=None)
def _squeezed_row_block_ok(m, wc, cy, dtype) -> bool:
    def k(x_ref, o_ref):
        o_ref[...] = x_ref[...]

    try:
        base = (jnp.arange(8 * m * wc, dtype=jnp.int32) % 241).astype(jnp.float32)
        x = base.reshape(8, m, wc).astype(dtype)
        fn = pl.pallas_call(
            k,
            out_shape=jax.ShapeDtypeStruct((8, wc), dtype),
            grid=(1,),
            in_specs=[pl.BlockSpec((8, None, wc), lambda t: (0, cy, 0))],
            out_specs=pl.BlockSpec((8, wc), lambda t: (0, 0)),
        )
        got = jax.block_until_ready(fn(x))
        return bool(jnp.array_equal(got, x[:, cy, :]))
    except Exception:
        return False


# --------------------------------------------------------------------------- #
# Wrapper
# --------------------------------------------------------------------------- #
def center_pixel_extractor(x: jax.Array, module_size: int) -> jax.Array:
    """Pallas TPU port of CenterPixelExtractor.forward. x: (N, 1, H, W)."""
    n, c, h, w = x.shape
    if c != 1:
        raise ValueError("CenterPixelExtractor expects a single input channel")
    m = int(module_size)
    center = m // 2 + 1  # == int(module_size / 2) + 1 in the PyTorch module
    if not (0 <= center < m):
        raise ValueError(
            f"module_size={m} puts the center tap at index {center}, outside the "
            f"{m}x{m} kernel (the PyTorch module would fail the same way)")
    ho = (h - m) // m + 1
    wo = (w - m) // m + 1
    if ho <= 0 or wo <= 0:
        raise ValueError("input smaller than module_size")
    cy = cx = center

    hc, wc = ho * m, wo * m
    r = n * ho
    # Crop to whole modules (no-op when H, W divide module_size) -- exactly the
    # pixels the strided conv ignores.
    crop = x[:, :, :hc, :wc]

    # ---- row-selection strategy (DMA-level 1/m read whenever possible) ----
    if wc % 128 == 0:
        row_mode = "dma2d"
    elif _squeezed_row_block_ok(m, wc, cy, x.dtype):
        row_mode = "dma3d"
    else:
        row_mode = "full"

    if row_mode == "full":
        probe_block_w, probe_start = m * wc, cy * wc + cx
    else:
        probe_block_w, probe_start = wc, cx
    use_strided = _strided_lane_read_ok(probe_block_w, probe_start, wo, m, x.dtype)

    def run(row_mode: str, use_strided: bool) -> jax.Array:
        if row_mode == "dma2d":
            xv = crop.reshape(r, m * wc)
            block_w, seg_start = wc, 0
            make_in_spec = lambda tr: pl.BlockSpec((tr, wc), lambda t: (t, cy))
        elif row_mode == "dma3d":
            xv = crop.reshape(r, m, wc)
            block_w, seg_start = wc, 0
            make_in_spec = lambda tr: pl.BlockSpec((tr, None, wc),
                                                   lambda t: (t, cy, 0))
        else:  # "full": read the whole m*Wc row, pick the sub-row in VMEM.
            xv = crop.reshape(r, m * wc)
            block_w, seg_start = m * wc, cy * wc
            make_in_spec = lambda tr: pl.BlockSpec((tr, m * wc), lambda t: (t, 0))

        # Generation-aware tile sizing: large tiles amortize the ~0.35us/step
        # overhead while double-buffered inputs stay well inside VMEM.
        if use_strided:
            big_vmem = _vmem_capacity_bytes() >= 96 * _MIB  # v5e/v6e: 128 MiB
            target_tile_bytes = (16 if big_vmem else 8) * _MIB
            vmem_limit = (64 if big_vmem else 40) * _MIB
        else:  # MXU fallback keeps the previously-proven conservative sizing.
            target_tile_bytes = 4 * _MIB
            vmem_limit = 32 * _MIB

        row_bytes = block_w * x.dtype.itemsize
        cap = max(1, target_tile_bytes // row_bytes)
        tile_r = r if r <= cap else max(8, (cap // 8) * 8)
        tile_r = min(tile_r, r)
        nb = pl.cdiv(r, tile_r)
        # v7x megacore: the single "parallel" axis shards across both TensorCores;
        # keep >= 2 (preferably an even number of) blocks when there is work.
        if nb == 1 and r >= 16:
            tile_r = _round_up(pl.cdiv(r, 2), 8)
        elif nb > 1 and nb % 2 == 1:
            cand = _round_up(pl.cdiv(r, nb + 1), 8)
            if cand >= 8 and pl.cdiv(r, cand) % 2 == 0:
                tile_r = cand
        nb = pl.cdiv(r, tile_r)

        if use_strided:
            kernel = functools.partial(_strided_copy_kernel,
                                       start=seg_start + cx, size=wo, stride=m)
        else:
            kernel = functools.partial(_onehot_matmul_kernel,
                                       seg_start=seg_start, seg_w=wc,
                                       wo=wo, m=m, cx=cx)

        return pl.pallas_call(
            kernel,
            out_shape=jax.ShapeDtypeStruct((r, wo), x.dtype),
            grid=(nb,),
            in_specs=[make_in_spec(tile_r)],
            out_specs=pl.BlockSpec((tile_r, wo), lambda t: (t, 0)),
            compiler_params=pltpu.CompilerParams(
                dimension_semantics=("parallel",),
                vmem_limit_bytes=vmem_limit,
            ),
        )(xv)

    try:
        out2 = run(row_mode, use_strided)
    except Exception:
        if row_mode == "full" and not use_strided:
            raise
        # Last-resort conservative configuration (full-row read + one-hot MXU
        # compaction) -- the previously proven-to-lower path.
        out2 = run("full", False)

    return out2.reshape(n, 1, ho, wo)


if __name__ == "__main__":
    key = jax.random.PRNGKey(0)

    def reference(x, m):
        c = m // 2 + 1
        ho = (x.shape[2] - m) // m + 1
        wo = (x.shape[3] - m) // m + 1
        return x[:, :, c::m, c::m][:, :, :ho, :wo]

    cases = [
        # (batch, H, W, module_size, dtype)
        (2, 128, 128, 4, jnp.float32),   # lane-aligned DMA row-select, f32
        (2, 64, 128, 4, jnp.bfloat16),   # lane-aligned DMA row-select, bf16
        (2, 18, 18, 3, jnp.float32),     # unaligned width -> squeezed-row DMA path
        (2, 19, 21, 4, jnp.float32),     # H, W not divisible by module_size (cropped like the conv)
    ]
    for idx, (n, h, w, m, dt) in enumerate(cases):
        key, sub = jax.random.split(key)
        x = jax.random.normal(sub, (n, 1, h, w), dtype=jnp.float32).astype(dt)
        y = jax.block_until_ready(center_pixel_extractor(x, m))
        y_ref = reference(x, m)
        assert y.shape == y_ref.shape, (idx, y.shape, y_ref.shape)
        assert jnp.allclose(y.astype(jnp.float32), y_ref.astype(jnp.float32),
                            atol=1e-5, rtol=1e-5), f"case {idx}: mismatch"
    print("KERNEL_OK")
</pallas_src>

<mosaic_0001>
module attributes {stable_mosaic.version = 11 : i64} {
  func.func @_strided_copy_kernel(%arg0: i32, %arg1: memref<8x128xf32, #tpu.memory_space<vmem>>, %arg2: memref<8x32xf32, #tpu.memory_space<vmem>>) attributes {dimension_semantics = [#tpu.dimension_semantics<arbitrary>], iteration_bounds = array<i64: 1>, scalar_prefetch = 0 : i64, scratch_operands = 0 : i64, tpu.core_type = #tpu.core_type<tc>, window_params = [{pipeline_mode = #tpu.pipeline_mode<synchronous>, transform_indices = @transform_0, window_bounds = array<i64: 8, 128>}, {pipeline_mode = #tpu.pipeline_mode<synchronous>, transform_indices = @transform_1, window_bounds = array<i64: 8, 32>}]} {
    %c0 = arith.constant 0 : index
    %c3 = arith.constant 3 : index
    %0 = tpu.strided_load %arg1[%c0, %c3] {strides = array<i32: 1, 4>} : memref<8x128xf32, #tpu.memory_space<vmem>>, vector<8x32xf32>
    %c0_0 = arith.constant 0 : index
    %c0_1 = arith.constant 0 : index
    %1 = vector.load %arg2[%c0_0, %c0_1] : memref<8x32xf32, #tpu.memory_space<vmem>>, vector<8x32xf32>
    tpu.vector_store %arg2[%c0_0, %c0_1], %0 {strides = array<i32>} : memref<8x32xf32, #tpu.memory_space<vmem>>, vector<8x32xf32>,
    return
  }
  func.func @transform_0(%arg0: i32) -> (i32, i32) {
    %c0_i32 = arith.constant 0 : i32
    %c0_i32_0 = arith.constant 0 : i32
    %c0_i32_1 = arith.constant 0 : i32
    return %c0_i32, %c0_i32_0 : i32, i32
  }
  func.func @transform_1(%arg0: i32) -> (i32, i32) {
    %c0_i32 = arith.constant 0 : i32
    %c0_i32_0 = arith.constant 0 : i32
    %c0_i32_1 = arith.constant 0 : i32
    return %c0_i32, %c0_i32_0 : i32, i32
  }
}

module attributes {stable_mosaic.version = 11 : i64} {
  func.func @_onehot_matmul_kernel(%arg0: i32, %arg1: memref<32x128xf32, #tpu.memory_space<vmem>>, %arg2: memref<32x32xf32, #tpu.memory_space<vmem>>) attributes {dimension_semantics = [#tpu.dimension_semantics<parallel>], iteration_bounds = array<i64: 2>, scalar_prefetch = 0 : i64, scratch_operands = 0 : i64, tpu.core_type = #tpu.core_type<tc>, window_params = [{transform_indices = @transform_0, window_bounds = array<i64: 32, 128>}, {transform_indices = @transform_1, window_bounds = array<i64: 32, 32>}]} {
    %c0 = arith.constant 0 : index
    %c0_0 = arith.constant 0 : index
    %0 = vector.load %arg1[%c0, %c0_0] : memref<32x128xf32, #tpu.memory_space<vmem>>, vector<32x128xf32>
    %1 = tpu.iota {dimensions = array<i32: 0>} : vector<128x32xi32>
    %2 = tpu.iota {dimensions = array<i32: 1>} : vector<128x32xi32>
    %c4_i32 = arith.constant 4 : i32
    %3 = vector.broadcast %c4_i32 : i32 to vector<128x32xi32>
    %4 = arith.muli %2, %3 : vector<128x32xi32>
    %c3_i32 = arith.constant 3 : i32
    %5 = vector.broadcast %c3_i32 : i32 to vector<128x32xi32>
    %6 = arith.addi %4, %5 : vector<128x32xi32>
    %7 = arith.cmpi eq, %1, %6 : vector<128x32xi32>
    %8 = arith.extui %7 : vector<128x32xi1> to vector<128x32xi32>
    %9 = arith.sitofp %8 : vector<128x32xi32> to vector<128x32xf32>
    %cst = arith.constant dense<0.000000e+00> : vector<32x32xf32>
    %10 = tpu.matmul %0, %9, %cst {dimension_numbers = #tpu.dot_dimension_numbers<[1], [0], [0], [1], [0, 0, 1, 1], [], []>, precision = #tpu.contract_precision<fp32>} : vector<32x128xf32>, vector<128x32xf32>, vector<32x32xf32> -> vector<32x32xf32>
    %c0_1 = arith.constant 0 : index
    %c0_2 = arith.constant 0 : index
    %11 = vector.load %arg2[%c0_1, %c0_2] : memref<32x32xf32, #tpu.memory_space<vmem>>, vector<32x32xf32>
    tpu.vector_store %arg2[%c0_1, %c0_2], %10 {strides = array<i32>} : memref<32x32xf32, #tpu.memory_space<vmem>>, vector<32x32xf32>,
    return
  }
  func.func @transform_0(%arg0: i32) -> (i32, i32) {
    %c3_i32 = arith.constant 3 : i32
    %c0_i32 = arith.constant 0 : i32
    return %arg0, %c3_i32 : i32, i32
  }
  func.func @transform_1(%arg0: i32) -> (i32, i32) {
    %c0_i32 = arith.constant 0 : i32
    %c0_i32_0 = arith.constant 0 : i32
    return %arg0, %c0_i32 : i32, i32
  }
}

module attributes {stable_mosaic.version = 11 : i64} {
  func.func @_onehot_matmul_kernel(%arg0: i32, %arg1: memref<32x512xf32, #tpu.memory_space<vmem>>, %arg2: memref<32x32xf32, #tpu.memory_space<vmem>>) attributes {dimension_semantics = [#tpu.dimension_semantics<parallel>], iteration_bounds = array<i64: 2>, scalar_prefetch = 0 : i64, scratch_operands = 0 : i64, tpu.core_type = #tpu.core_type<tc>, window_params = [{transform_indices = @transform_0, window_bounds = array<i64: 32, 512>}, {transform_indices = @transform_1, window_bounds = array<i64: 32, 32>}]} {
    %c0 = arith.constant 0 : index
    %c384 = arith.constant 384 : index
    %0 = vector.load %arg1[%c0, %c384] : memref<32x512xf32, #tpu.memory_space<vmem>>, vector<32x128xf32>
    %1 = tpu.iota {dimensions = array<i32: 0>} : vector<128x32xi32>
    %2 = tpu.iota {dimensions = array<i32: 1>} : vector<128x32xi32>
    %c4_i32 = arith.constant 4 : i32
    %3 = vector.broadcast %c4_i32 : i32 to vector<128x32xi32>
    %4 = arith.muli %2, %3 : vector<128x32xi32>
    %c3_i32 = arith.constant 3 : i32
    %5 = vector.broadcast %c3_i32 : i32 to vector<128x32xi32>
    %6 = arith.addi %4, %5 : vector<128x32xi32>
    %7 = arith.cmpi eq, %1, %6 : vector<128x32xi32>
    %8 = arith.extui %7 : vector<128x32xi1> to vector<128x32xi32>
    %9 = arith.sitofp %8 : vector<128x32xi32> to vector<128x32xf32>
    %cst = arith.constant dense<0.000000e+00> : vector<32x32xf32>
    %10 = tpu.matmul %0, %9, %cst {dimension_numbers = #tpu.dot_dimension_numbers<[1], [0], [0], [1], [0, 0, 1, 1], [], []>, precision = #tpu.contract_precision<fp32>} : vector<32x128xf32>, vector<128x32xf32>, vector<32x32xf32> -> vector<32x32xf32>
    %c0_0 = arith.constant 0 : index
    %c0_1 = arith.constant 0 : index
    %11 = vector.load %arg2[%c0_0, %c0_1] : memref<32x32xf32, #tpu.memory_space<vmem>>, vector<32x32xf32>
    tpu.vector_store %arg2[%c0_0, %c0_1], %10 {strides = array<i32>} : memref<32x32xf32, #tpu.memory_space<vmem>>, vector<32x32xf32>,
    return
  }
  func.func @transform_0(%arg0: i32) -> (i32, i32) {
    %c0_i32 = arith.constant 0 : i32
    %c0_i32_0 = arith.constant 0 : i32
    return %arg0, %c0_i32 : i32, i32
  }
  func.func @transform_1(%arg0: i32) -> (i32, i32) {
    %c0_i32 = arith.constant 0 : i32
    %c0_i32_0 = arith.constant 0 : i32
    return %arg0, %c0_i32 : i32, i32
  }
}

</mosaic_0001>

<llo_original>
// kernel: tpu_custom_call.1
$region0: #{tpu_custom_call.1}
  #allocation0 [shape = 'u32[]', space=smem, size = 0x4, offset = 0x4, fixed_abs, tag = 'smem constant byte address 0x4 - core index']
  #allocation1 [shape = 'u32[144,128]{1,0:T(1,128)}', space=vmem, size = 0x12000, scoped, tag = 'internal scratch']
  %s0 = inlined_call_operand.hbm [shape: f32[64,512], index: 0, kind: input, shape index: {}]
  %s1 = inlined_call_operand.vmem [shape: f32[64,32], index: 1, kind: output, shape index: {}]
  %s2 = sld [smem:[#allocation0]]
  $region41: #{tpu_custom_call.1} parent=0
    _
  %s4 = ssub.s32 1, %s2
  %s5 = scalar_select 0, %s4, %s2
  $region1: #{tpu_custom_call.1} parent=0
    #allocation2 [shape = 'u8[32768]{0}', space=vmem, size = 0x8000, scoped, tag = 'input window, operand 0']
    #allocation3 [shape = 's32[2]{0}', space=sflag, size = 0x8, scoped, tag = 'scoped memory for tpu_custom_call.1']
    %6 = vsyncpa [#allocation3], 0
    %s7 = scalar_lea.sflag [#allocation3], 1
    %8 = vsyncpa %s7, 0
    loop: start=0, step=1, limit=4
    $region2: #{tpu_custom_call.1} parent=1 // loop_pre_header
      _
    $region3: #{tpu_custom_call.1} parent=1 // loop_header
      %s10 = sphi 0, %s14
      %p11 = scmp.ge.s32.totalorder %s10, 4
      %s20 = sphi 0, %s22
      %s23 = sphi 0, %s20
      %s24 = sphi 0, %s23
      %s40 = sphi 0, %s24
      %s46 = sphi 0, %s48
      %s49 = sphi 0, %s46
      %s50 = sphi 0, %s49
      %s66 = sphi 0, %s50
    $region4: #{tpu_custom_call.1} parent=1 // loop_header_branch
      %13 = sbr.rel (%p11) target = $region8
    $region5: #{tpu_custom_call.1} parent=1 // loop_body
      %s15 = ssub.s32 %s10, 1
      %s16 = ssub.s32 %s10, 2
      %s17 = sadd.s32 %s10, 1
      %s18 = ssub.s32 %s10, %s17
      %p19 = scmp.eq.s32.totalorder %s18, 0
      %s21 = sadd.s32 %s20, 1
      %s22 = scalar_select %p19, %s20, %s21
      %p25 = pneg %p19
      %p26 = scmp.eq.s32.totalorder %s10, 1
      %p27 = por %p25, %p26
      %p28 = scmp.ne.s32.totalorder %s20, %s23
      %p29 = scmp.eq.s32.totalorder %s10, 0
      %p30 = por %p28, %p29
      %p31 = scmp.ne.s32.totalorder %s20, %s23
      %p32 = scmp.eq.s32.totalorder %s15, 1
      %p33 = por %p31, %p32
      %p34 = scmp.ne.s32.totalorder %s23, %s24
      %p35 = scmp.eq.s32.totalorder %s15, 0
      %p36 = por %p34, %p35
      %p37 = scmp.ne.s32.totalorder %s23, %s24
      %p38 = scmp.eq.s32.totalorder %s16, 1
      %p39 = por %p37, %p38
      %p41 = scmp.ne.s32.totalorder %s24, %s40
      %p42 = scmp.eq.s32.totalorder %s16, 0
      %p43 = por %p41, %p42
      %s44 = ssub.s32 %s10, %s17
      %p45 = scmp.eq.s32.totalorder %s44, 0
      %s47 = sadd.s32 %s46, 1
      %s48 = scalar_select %p45, %s46, %s47
      %p51 = pneg %p45
      %p52 = scmp.eq.s32.totalorder %s10, 1
      %p53 = por %p51, %p52
      %p54 = scmp.ne.s32.totalorder %s46, %s49
      %p55 = scmp.eq.s32.totalorder %s10, 0
      %p56 = por %p54, %p55
      %p57 = scmp.ne.s32.totalorder %s46, %s49
      %p58 = scmp.eq.s32.totalorder %s15, 1
      %p59 = por %p57, %p58
      %p60 = scmp.ne.s32.totalorder %s49, %s50
      %p61 = scmp.eq.s32.totalorder %s15, 0
      %p62 = por %p60, %p61
      %p63 = scmp.ne.s32.totalorder %s49, %s50
      %p64 = scmp.eq.s32.totalorder %s16, 1
      %p65 = por %p63, %p64
      %p67 = scmp.ne.s32.totalorder %s50, %s66
      %p68 = scmp.eq.s32.totalorder %s16, 0
      %p69 = por %p67, %p68
      %p70 = scmp.le.s32.totalorder 1, %s10
      %p71 = scmp.lt.s32.totalorder %s10, 3
      %p72 = pnand %p70, %p71
      %p73 = pneg %p72
      // Predicated region
      $region9: #{tpu_custom_call.1} parent=5 // pred_check
        _
      $region10: #{tpu_custom_call.1} parent=5 // pred_check_branch
        %75 = sbr.rel (%p72) target = $region12
      $region11: #{tpu_custom_call.1} parent=5 // pred_region
        %s76 = ssub.s32 %s10, 1
      $region12: #{tpu_custom_call.1} parent=5 // pred_fallthru
        _
      %p77 = scmp.lt.s32.totalorder %s10, 2
      // Predicated region
      $region13: #{tpu_custom_call.1} parent=5 // pred_check
        %p78 = pneg %p77
      $region14: #{tpu_custom_call.1} parent=5 // pred_check_branch
        %80 = sbr.rel (%p78) target = $region16
      $region15: #{tpu_custom_call.1} parent=5 // pred_region
        // Predicated region
        $region17: #{tpu_custom_call.1} parent=15 // pred_check
          %p81 = pneg %p30
        $region18: #{tpu_custom_call.1} parent=15 // pred_check_branch
          %83 = sbr.rel (%p81) target = $region20
        $region19: #{tpu_custom_call.1} parent=15 // pred_region
          %s84 = sand.u32 %s20, 1
          %s85 = scalar_lea.sflag [#allocation3], %s84
          %s86 = sand.u32 %s20, 1
          %s87 = smul.addr %s86, 32
          %s88 = scalar_lea.vmem [#allocation2], %s87
          %s89 = smul.u32 4, %s10
          %s91 = ssub.s32 512, 512
          %92 = vsyncadd %s85, %s91
          %s93 = smul.addr %s89, 4
          %s94 = sadd.s32 3, %s93
          %s95 = smul.addr %s94, 128
          %s96 = scalar_lea.hbm %s0, %s95
          %s97 = sshll.u32 %s88, 4
          %s98 = int_to_ptr.vmem [resolvable:$true] %s97
          %103 = dma.hbm_to_vmem [thread:$0]  %s96, 512, %s98, %s85, 512, 128, 8
        $region20: #{tpu_custom_call.1} parent=15 // pred_fallthru
          _
      $region16: #{tpu_custom_call.1} parent=5 // pred_fallthru
        _
      %p104 = scmp.le.s32.totalorder 1, %s10
      %p105 = scmp.lt.s32.totalorder %s10, 3
      %p106 = pnand %p104, %p105
      %p107 = pneg %p106
      // Predicated region
      $region21: #{tpu_custom_call.1} parent=5 // pred_check
        _
      $region22: #{tpu_custom_call.1} parent=5 // pred_check_branch
        %109 = sbr.rel (%p106) target = $region24
      $region23: #{tpu_custom_call.1} parent=5 // pred_region
        %s110 = ssub.s32 %s10, 1
        %s111 = sand.u32 %s23, 1
        %s112 = scalar_lea.sflag [#allocation3], %s111
        %s113 = sand.u32 %s23, 1
        %s114 = smul.addr %s113, 32
        %s115 = scalar_lea.vmem [#allocation2], %s114
        // Predicated region
        $region25: #{tpu_custom_call.1} parent=23 // pred_check
          %p116 = pneg %p36
        $region26: #{tpu_custom_call.1} parent=23 // pred_check_branch
          %118 = sbr.rel (%p116) target = $region28
        $region27: #{tpu_custom_call.1} parent=23 // pred_region
          %119 = dma.done %s112, 512
        $region28: #{tpu_custom_call.1} parent=23 // pred_fallthru
          _
        %s120 = sand.u32 %s23, 1
        %s121 = scalar_lea.sflag [#allocation3], %s120
        %s122 = sand.u32 %s23, 1
        %s123 = smul.addr %s122, 32
        %s124 = scalar_lea.vmem [#allocation2], %s123
        %p125 = pneg %p36
        %p126 = pneg %p33
        %p127 = pneg %p62
        %p128 = pneg %p59
        %s129 = smul.u32 4, %s15
        %p130 = scmp.lt.s32.totalorder %s129, 7
        %s131 = scalar_select %p130, %s129, 7
        %s132 = smul.addr %s131, 8
        %s133 = scalar_lea.vmem %s1, %s132
        %s134 = smul.u32 4, %s15
        %s135 = smul.u32 4, %s15
        %p136 = scmp.lt.s32.totalorder %s135, 7
        %s137 = scalar_select %p136, %s135, 7
        %s138 = smul.addr %s137, 8
        %s139 = scalar_lea.vmem %s1, %s138
        %s140 = smul.u32 4, %s15
        %v141 = vld [vmem:[%s115] sm:$0xff]
        %v142 = vld [vmem:[%s115 + $0x8] sm:$0xff]
        %v143 = vld [vmem:[%s115 + $0x10] sm:$0xff]
        %v144 = vld [vmem:[%s115 + $0x18] sm:$0xff]
        %v145 = vlaneseq
        %v146 = vshrl.u32 %v145, 7
        %v147 = vadd.s32 %v146, 8
        %v148 = vadd.s32 %v146, 16
        %v149 = vadd.s32 %v146, 24
        %v150 = vadd.s32 %v146, 32
        %v151 = vadd.s32 %v146, 40
        %v152 = vadd.s32 %v146, 48
        %v153 = vadd.s32 %v146, 56
        %v154 = vadd.s32 %v146, 64
        %v155 = vadd.s32 %v146, 72
        %v156 = vadd.s32 %v146, 80
        %v157 = vadd.s32 %v146, 88
        %v158 = vadd.s32 %v146, 96
        %v159 = vadd.s32 %v146, 104
        %v160 = vadd.s32 %v146, 112
        %v161 = vadd.s32 %v146, 120
        %v162 = vlaneseq
        %v163 = vand.u32 %v162, 127
        %v164 = vmul.u32 %v163, 4
        %v165 = vadd.s32 %v164, 3
        %vm166 = vcmp.eq.s32.totalorder %v146, %v165
        %vm167 = vcmp.eq.s32.totalorder %v147, %v165
        %vm168 = vcmp.eq.s32.totalorder %v148, %v165
        %vm169 = vcmp.eq.s32.totalorder %v149, %v165
        %vm170 = vcmp.eq.s32.totalorder %v150, %v165
        %vm171 = vcmp.eq.s32.totalorder %v151, %v165
        %vm172 = vcmp.eq.s32.totalorder %v152, %v165
        %vm173 = vcmp.eq.s32.totalorder %v153, %v165
        %vm174 = vcmp.eq.s32.totalorder %v154, %v165
        %vm175 = vcmp.eq.s32.totalorder %v155, %v165
        %vm176 = vcmp.eq.s32.totalorder %v156, %v165
        %vm177 = vcmp.eq.s32.totalorder %v157, %v165
        %vm178 = vcmp.eq.s32.totalorder %v158, %v165
        %vm179 = vcmp.eq.s32.totalorder %v159, %v165
        %vm180 = vcmp.eq.s32.totalorder %v160, %v165
        %vm181 = vcmp.eq.s32.totalorder %v161, %v165
        %v182 = vsel %vm166, 1, 0
        %v183 = vsel %vm167, 1, 0
        %v184 = vsel %vm168, 1, 0
        %v185 = vsel %vm169, 1, 0
        %v186 = vsel %vm170, 1, 0
        %v187 = vsel %vm171, 1, 0
        %v188 = vsel %vm172, 1, 0
        %v189 = vsel %vm173, 1, 0
        %v190 = vsel %vm174, 1, 0
        %v191 = vsel %vm175, 1, 0
        %v192 = vsel %vm176, 1, 0
        %v193 = vsel %vm177, 1, 0
        %v194 = vsel %vm178, 1, 0
        %v195 = vsel %vm179, 1, 0
        %v196 = vsel %vm180, 1, 0
        %v197 = vsel %vm181, 1, 0
        %v198 = vcvt.s32.f32 %v182
        %v199 = vcvt.s32.f32 %v183
        %v200 = vcvt.s32.f32 %v184
        %v201 = vcvt.s32.f32 %v185
        %v202 = vcvt.s32.f32 %v186
        %v203 = vcvt.s32.f32 %v187
        %v204 = vcvt.s32.f32 %v188
        %v205 = vcvt.s32.f32 %v189
        %v206 = vcvt.s32.f32 %v190
        %v207 = vcvt.s32.f32 %v191
        %v208 = vcvt.s32.f32 %v192
        %v209 = vcvt.s32.f32 %v193
        %v210 = vcvt.s32.f32 %v194
        %v211 = vcvt.s32.f32 %v195
        %v212 = vcvt.s32.f32 %v196
        %v213 = vcvt.s32.f32 %v197
        %214 = vmatprep.subr.mxu0 0.0
        %v215 = vand.u32 %v198, 4294901760
        %216 = vmatpush1.msra.mxu0 %v215
        %217 = vmatprep.subr.mxu0 0.0
        %v218 = vand.u32 %v199, 4294901760
        %219 = vmatpush1.msra.mxu0 %v218
        %220 = vmatprep.subr.mxu0 0.0
        %v221 = vand.u32 %v200, 4294901760
        %222 = vmatpush1.msra.mxu0 %v221
        %223 = vmatprep.subr.mxu0 0.0
        %v224 = vand.u32 %v201, 4294901760
        %225 = vmatpush1.msra.mxu0 %v224
        %226 = vmatprep.subr.mxu0 0.0
        %v227 = vand.u32 %v202, 4294901760
        %228 = vmatpush1.msra.mxu0 %v227
        %229 = vmatprep.subr.mxu0 0.0
        %v230 = vand.u32 %v203, 4294901760
        %231 = vmatpush1.msra.mxu0 %v230
        %232 = vmatprep.subr.mxu0 0.0
        %v233 = vand.u32 %v204, 4294901760
        %234 = vmatpush1.msra.mxu0 %v233
        %235 = vmatprep.subr.mxu0 0.0
        %v236 = vand.u32 %v205, 4294901760
        %237 = vmatpush1.msra.mxu0 %v236
        %238 = vmatprep.subr.mxu0 0.0
        %v239 = vand.u32 %v206, 4294901760
        %240 = vmatpush1.msra.mxu0 %v239
        %241 = vmatprep.subr.mxu0 0.0
        %v242 = vand.u32 %v207, 4294901760
        %243 = vmatpush1.msra.mxu0 %v242
        %244 = vmatprep.subr.mxu0 0.0
        %v245 = vand.u32 %v208, 4294901760
        %246 = vmatpush1.msra.mxu0 %v245
        %247 = vmatprep.subr.mxu0 0.0
        %v248 = vand.u32 %v209, 4294901760
        %249 = vmatpush1.msra.mxu0 %v248
        %250 = vmatprep.subr.mxu0 0.0
        %v251 = vand.u32 %v210, 4294901760
        %252 = vmatpush1.msra.mxu0 %v251
        %253 = vmatprep.subr.mxu0 0.0
        %v254 = vand.u32 %v211, 4294901760
        %255 = vmatpush1.msra.mxu0 %v254
        %256 = vmatprep.subr.mxu0 0.0
        %v257 = vand.u32 %v212, 4294901760
        %258 = vmatpush1.msra.mxu0 %v257
        %259 = vmatprep.subr.mxu0 0.0
        %v260 = vand.u32 %v213, 4294901760
        %261 = vmatpush1.msra.mxu0 %v260
        %262 = vmatprep.subr.mxu0 0.0
        %263 = vmatpush1.msra.mxu0 0.0
        %264 = vmatprep.subr.mxu0 0.0
        %265 = vmatpush1.msra.mxu0 0.0
        %266 = vmatprep.subr.mxu0 0.0
        %267 = vmatpush1.msra.mxu0 0.0
        %268 = vmatprep.subr.mxu0 0.0
        %269 = vmatpush1.msra.mxu0 0.0
        %270 = vmatprep.subr.mxu0 0.0
        %271 = vmatpush1.msra.mxu0 0.0
        %272 = vmatprep.subr.mxu0 0.0
        %273 = vmatpush1.msra.mxu0 0.0
        %274 = vmatprep.subr.mxu0 0.0
        %275 = vmatpush1.msra.mxu0 0.0
        %276 = vmatprep.subr.mxu0 0.0
        %277 = vmatpush1.msra.mxu0 0.0
        %278 = vmatprep.subr.mxu0 0.0
        %279 = vmatpush1.msra.mxu0 0.0
        %280 = vmatprep.subr.mxu0 0.0
        %281 = vmatpush1.msra.mxu0 0.0
        %282 = vmatprep.subr.mxu0 0.0
        %283 = vmatpush1.msra.mxu0 0.0
        %284 = vmatprep.subr.mxu0 0.0
        %285 = vmatpush1.msra.mxu0 0.0
        %286 = vmatprep.subr.mxu0 0.0
        %287 = vmatpush1.msra.mxu0 0.0
        %288 = vmatprep.subr.mxu0 0.0
        %289 = vmatpush1.msra.mxu0 0.0
        %290 = vmatprep.subr.mxu0 0.0
        %291 = vmatpush1.msra.mxu0 0.0
        %292 = vmatprep.subr.mxu0 0.0
        %293 = vmatpush1.msra.mxu0 0.0
        %294 = vmatprep.mubr.f32.mxu0 0.0
        %v295 = vand.u32 %v141, 4294901760
        %v296 = vsub.f32 %v141, %v295
        %v297 = vand.u32 %v296, 4294901760
        %v298 = vsub.f32 %v296, %v297
        %v299 = vand.u32 %v298, 4294901760
        %300 = vmatmul.mubr.f32.gmra.mrb[0].mxu0 %v299
        %v301 = vpop.f32.mrb[0].mxu0
        %v302 = vadd.f32 0.0, %v301
        %v303 = vpop.f32.mrb[0].mxu0
        %304 = vmatprep.mubr.f32.mxu0 0.0
        %v305 = vand.u32 %v142, 4294901760
        %v306 = vsub.f32 %v142, %v305
        %v307 = vand.u32 %v306, 4294901760
        %v308 = vsub.f32 %v306, %v307
        %v309 = vand.u32 %v308, 4294901760
        %310 = vmatmul.mubr.f32.gmra.mrb[0].mxu0 %v309
        %v311 = vpop.f32.mrb[0].mxu0
        %v312 = vadd.f32 0.0, %v311
        %v313 = vpop.f32.mrb[0].mxu0
        %314 = vmatprep.mubr.f32.mxu0 0.0
        %v315 = vand.u32 %v143, 4294901760
        %v316 = vsub.f32 %v143, %v315
        %v317 = vand.u32 %v316, 4294901760
        %v318 = vsub.f32 %v316, %v317
        %v319 = vand.u32 %v318, 4294901760
        %320 = vmatmul.mubr.f32.gmra.mrb[0].mxu0 %v319
        %v321 = vpop.f32.mrb[0].mxu0
        %v322 = vadd.f32 0.0, %v321
        %v323 = vpop.f32.mrb[0].mxu0
        %324 = vmatprep.mubr.f32.mxu0 0.0
        %v325 = vand.u32 %v144, 4294901760
        %v326 = vsub.f32 %v144, %v325
        %v327 = vand.u32 %v326, 4294901760
        %v328 = vsub.f32 %v326, %v327
        %v329 = vand.u32 %v328, 4294901760
        %330 = vmatmul.mubr.f32.gmra.mrb[0].mxu0 %v329
        %v331 = vpop.f32.mrb[0].mxu0
        %v332 = vadd.f32 0.0, %v331
        %v333 = vpop.f32.mrb[0].mxu0
        %334 = vdwg.mxu0
        %335 = vmatprep.subr.mxu0 0.0
        %v336 = vand.u32 %v198, 4294901760
        %v337 = vsub.f32 %v198, %v336
        %v338 = vand.u32 %v337, 4294901760
        %v339 = vsub.f32 %v337, %v338
        %v340 = vand.u32 %v339, 4294901760
        %341 = vmatpush1.msra.mxu0 %v340
        %342 = vmatprep.subr.mxu0 0.0
        %v343 = vand.u32 %v199, 4294901760
        %v344 = vsub.f32 %v199, %v343
        %v345 = vand.u32 %v344, 4294901760
        %v346 = vsub.f32 %v344, %v345
        %v347 = vand.u32 %v346, 4294901760
        %348 = vmatpush1.msra.mxu0 %v347
        %349 = vmatprep.subr.mxu0 0.0
        %v350 = vand.u32 %v200, 4294901760
        %v351 = vsub.f32 %v200, %v350
        %v352 = vand.u32 %v351, 4294901760
        %v353 = vsub.f32 %v351, %v352
        %v354 = vand.u32 %v353, 4294901760
        %355 = vmatpush1.msra.mxu0 %v354
        %356 = vmatprep.subr.mxu0 0.0
        %v357 = vand.u32 %v201, 4294901760
        %v358 = vsub.f32 %v201, %v357
        %v359 = vand.u32 %v358, 4294901760
        %v360 = vsub.f32 %v358, %v359
        %v361 = vand.u32 %v360, 4294901760
        %362 = vmatpush1.msra.mxu0 %v361
        %363 = vmatprep.subr.mxu0 0.0
        %v364 = vand.u32 %v202, 4294901760
        %v365 = vsub.f32 %v202, %v364
        %v366 = vand.u32 %v365, 4294901760
        %v367 = vsub.f32 %v365, %v366
        %v368 = vand.u32 %v367, 4294901760
        %369 = vmatpush1.msra.mxu0 %v368
        %370 = vmatprep.subr.mxu0 0.0
        %v371 = vand.u32 %v203, 4294901760
        %v372 = vsub.f32 %v203, %v371
        %v373 = vand.u32 %v372, 4294901760
        %v374 = vsub.f32 %v372, %v373
        %v375 = vand.u32 %v374, 4294901760
        %376 = vmatpush1.msra.mxu0 %v375
        %377 = vmatprep.subr.mxu0 0.0
        %v378 = vand.u32 %v204, 4294901760
        %v379 = vsub.f32 %v204, %v378
        %v380 = vand.u32 %v379, 4294901760
        %v381 = vsub.f32 %v379, %v380
        %v382 = vand.u32 %v381, 4294901760
        %383 = vmatpush1.msra.mxu0 %v382
        %384 = vmatprep.subr.mxu0 0.0
        %v385 = vand.u32 %v205, 4294901760
        %v386 = vsub.f32 %v205, %v385
        %v387 = vand.u32 %v386, 4294901760
        %v388 = vsub.f32 %v386, %v387
        %v389 = vand.u32 %v388, 4294901760
        %390 = vmatpush1.msra.mxu0 %v389
        %391 = vmatprep.subr.mxu0 0.0
        %v392 = vand.u32 %v206, 4294901760
        %v393 = vsub.f32 %v206, %v392
        %v394 = vand.u32 %v393, 4294901760
        %v395 = vsub.f32 %v393, %v394
        %v396 = vand.u32 %v395, 4294901760
        %397 = vmatpush1.msra.mxu0 %v396
        %398 = vmatprep.subr.mxu0 0.0
        %v399 = vand.u32 %v207, 4294901760
        %v400 = vsub.f32 %v207, %v399
        %v401 = vand.u32 %v400, 4294901760
        %v402 = vsub.f32 %v400, %v401
        %v403 = vand.u32 %v402, 4294901760
        %404 = vmatpush1.msra.mxu0 %v403
        %405 = vmatprep.subr.mxu0 0.0
        %v406 = vand.u32 %v208, 4294901760
        %v407 = vsub.f32 %v208, %v406
        %v408 = vand.u32 %v407, 4294901760
        %v409 = vsub.f32 %v407, %v408
        %v410 = vand.u32 %v409, 4294901760
        %411 = vmatpush1.msra.mxu0 %v410
        %412 = vmatprep.subr.mxu0 0.0
        %v413 = vand.u32 %v209, 4294901760
        %v414 = vsub.f32 %v209, %v413
        %v415 = vand.u32 %v414, 4294901760
        %v416 = vsub.f32 %v414, %v415
        %v417 = vand.u32 %v416, 4294901760
        %418 = vmatpush1.msra.mxu0 %v417
        %419 = vmatprep.subr.mxu0 0.0
        %v420 = vand.u32 %v210, 4294901760
        %v421 = vsub.f32 %v210, %v420
        %v422 = vand.u32 %v421, 4294901760
        %v423 = vsub.f32 %v421, %v422
        %v424 = vand.u32 %v423, 4294901760
        %425 = vmatpush1.msra.mxu0 %v424
        %426 = vmatprep.subr.mxu0 0.0
        %v427 = vand.u32 %v211, 4294901760
        %v428 = vsub.f32 %v211, %v427
        %v429 = vand.u32 %v428, 4294901760
        %v430 = vsub.f32 %v428, %v429
        %v431 = vand.u32 %v430, 4294901760
        %432 = vmatpush1.msra.mxu0 %v431
        %433 = vmatprep.subr.mxu0 0.0
        %v434 = vand.u32 %v212, 4294901760
        %v435 = vsub.f32 %v212, %v434
        %v436 = vand.u32 %v435, 4294901760
        %v437 = vsub.f32 %v435, %v436
        %v438 = vand.u32 %v437, 4294901760
        %439 = vmatpush1.msra.mxu0 %v438
        %440 = vmatprep.subr.mxu0 0.0
        %v441 = vand.u32 %v213, 4294901760
        %v442 = vsub.f32 %v213, %v441
        %v443 = vand.u32 %v442, 4294901760
        %v444 = vsub.f32 %v442, %v443
        %v445 = vand.u32 %v444, 4294901760
        %446 = vmatpush1.msra.mxu0 %v445
        %447 = vmatprep.subr.mxu0 0.0
        %448 = vmatpush1.msra.mxu0 0.0
        %449 = vmatprep.subr.mxu0 0.0
        %450 = vmatpush1.msra.mxu0 0.0
        %451 = vmatprep.subr.mxu0 0.0
        %452 = vmatpush1.msra.mxu0 0.0
        %453 = vmatprep.subr.mxu0 0.0
        %454 = vmatpush1.msra.mxu0 0.0
        %455 = vmatprep.subr.mxu0 0.0
        %456 = vmatpush1.msra.mxu0 0.0
        %457 = vmatprep.subr.mxu0 0.0
        %458 = vmatpush1.msra.mxu0 0.0
        %459 = vmatprep.subr.mxu0 0.0
        %460 = vmatpush1.msra.mxu0 0.0
        %461 = vmatprep.subr.mxu0 0.0
        %462 = vmatpush1.msra.mxu0 0.0
        %463 = vmatprep.subr.mxu0 0.0
        %464 = vmatpush1.msra.mxu0 0.0
        %465 = vmatprep.subr.mxu0 0.0
        %466 = vmatpush1.msra.mxu0 0.0
        %467 = vmatprep.subr.mxu0 0.0
        %468 = vmatpush1.msra.mxu0 0.0
        %469 = vmatprep.subr.mxu0 0.0
        %470 = vmatpush1.msra.mxu0 0.0
        %471 = vmatprep.subr.mxu0 0.0
        %472 = vmatpush1.msra.mxu0 0.0
        %473 = vmatprep.subr.mxu0 0.0
        %474 = vmatpush1.msra.mxu0 0.0
        %475 = vmatprep.subr.mxu0 0.0
        %476 = vmatpush1.msra.mxu0 0.0
        %477 = vmatprep.subr.mxu0 0.0
        %478 = vmatpush1.msra.mxu0 0.0
        %479 = vmatprep.mubr.f32.mxu0 0.0
        %v480 = vand.u32 %v141, 4294901760
        %481 = vmatmul.mubr.f32.gmra.mrb[0].mxu0 %v480
        %v482 = vpop.f32.mrb[0].mxu0
        %v483 = vadd.f32 %v302, %v482
        %v484 = vpop.f32.mrb[0].mxu0
        %485 = vmatprep.mubr.f32.mxu0 0.0
        %v486 = vand.u32 %v142, 4294901760
        %487 = vmatmul.mubr.f32.gmra.mrb[0].mxu0 %v486
        %v488 = vpop.f32.mrb[0].mxu0
        %v489 = vadd.f32 %v312, %v488
        %v490 = vpop.f32.mrb[0].mxu0
        %491 = vmatprep.mubr.f32.mxu0 0.0
        %v492 = vand.u32 %v143, 4294901760
        %493 = vmatmul.mubr.f32.gmra.mrb[0].mxu0 %v492
        %v494 = vpop.f32.mrb[0].mxu0
        %v495 = vadd.f32 %v322, %v494
        %v496 = vpop.f32.mrb[0].mxu0
        %497 = vmatprep.mubr.f32.mxu0 0.0
        %v498 = vand.u32 %v144, 4294901760
        %499 = vmatmul.mubr.f32.gmra.mrb[0].mxu0 %v498
        %v500 = vpop.f32.mrb[0].mxu0
        %v501 = vadd.f32 %v332, %v500
        %v502 = vpop.f32.mrb[0].mxu0
        %503 = vdwg.mxu0
        %504 = vmatprep.subr.mxu0 0.0
        %v505 = vand.u32 %v198, 4294901760
        %v506 = vsub.f32 %v198, %v505
        %507 = vmatpush1.msra.mxu0 %v506
        %508 = vmatprep.subr.mxu0 0.0
        %v509 = vand.u32 %v199, 4294901760
        %v510 = vsub.f32 %v199, %v509
        %511 = vmatpush1.msra.mxu0 %v510
        %512 = vmatprep.subr.mxu0 0.0
        %v513 = vand.u32 %v200, 4294901760
        %v514 = vsub.f32 %v200, %v513
        %515 = vmatpush1.msra.mxu0 %v514
        %516 = vmatprep.subr.mxu0 0.0
        %v517 = vand.u32 %v201, 4294901760
        %v518 = vsub.f32 %v201, %v517
        %519 = vmatpush1.msra.mxu0 %v518
        %520 = vmatprep.subr.mxu0 0.0
        %v521 = vand.u32 %v202, 4294901760
        %v522 = vsub.f32 %v202, %v521
        %523 = vmatpush1.msra.mxu0 %v522
        %524 = vmatprep.subr.mxu0 0.0
        %v525 = vand.u32 %v203, 4294901760
        %v526 = vsub.f32 %v203, %v525
        %527 = vmatpush1.msra.mxu0 %v526
        %528 = vmatprep.subr.mxu0 0.0
        %v529 = vand.u32 %v204, 4294901760
        %v530 = vsub.f32 %v204, %v529
        %531 = vmatpush1.msra.mxu0 %v530
        %532 = vmatprep.subr.mxu0 0.0
        %v533 = vand.u32 %v205, 4294901760
        %v534 = vsub.f32 %v205, %v533
        %535 = vmatpush1.msra.mxu0 %v534
        %536 = vmatprep.subr.mxu0 0.0
        %v537 = vand.u32 %v206, 4294901760
        %v538 = vsub.f32 %v206, %v537
        %539 = vmatpush1.msra.mxu0 %v538
        %540 = vmatprep.subr.mxu0 0.0
        %v541 = vand.u32 %v207, 4294901760
        %v542 = vsub.f32 %v207, %v541
        %543 = vmatpush1.msra.mxu0 %v542
        %544 = vmatprep.subr.mxu0 0.0
        %v545 = vand.u32 %v208, 4294901760
        %v546 = vsub.f32 %v208, %v545
        %547 = vmatpush1.msra.mxu0 %v546
        %548 = vmatprep.subr.mxu0 0.0
        %v549 = vand.u32 %v209, 4294901760
        %v550 = vsub.f32 %v209, %v549
        %551 = vmatpush1.msra.mxu0 %v550
        %552 = vmatprep.subr.mxu0 0.0
        %v553 = vand.u32 %v210, 4294901760
        %v554 = vsub.f32 %v210, %v553
        %555 = vmatpush1.msra.mxu0 %v554
        %556 = vmatprep.subr.mxu0 0.0
        %v557 = vand.u32 %v211, 4294901760
        %v558 = vsub.f32 %v211, %v557
        %559 = vmatpush1.msra.mxu0 %v558
        %560 = vmatprep.subr.mxu0 0.0
        %v561 = vand.u32 %v212, 4294901760
        %v562 = vsub.f32 %v212, %v561
        %563 = vmatpush1.msra.mxu0 %v562
        %564 = vmatprep.subr.mxu0 0.0
        %v565 = vand.u32 %v213, 4294901760
        %v566 = vsub.f32 %v213, %v565
        %567 = vmatpush1.msra.mxu0 %v566
        %568 = vmatprep.subr.mxu0 0.0
        %569 = vmatpush1.msra.mxu0 0.0
        %570 = vmatprep.subr.mxu0 0.0
        %571 = vmatpush1.msra.mxu0 0.0
        %572 = vmatprep.subr.mxu0 0.0
        %573 = vmatpush1.msra.mxu0 0.0
        %574 = vmatprep.subr.mxu0 0.0
        %575 = vmatpush1.msra.mxu0 0.0
        %576 = vmatprep.subr.mxu0 0.0
        %577 = vmatpush1.msra.mxu0 0.0
        %578 = vmatprep.subr.mxu0 0.0
        %579 = vmatpush1.msra.mxu0 0.0
        %580 = vmatprep.subr.mxu0 0.0
        %581 = vmatpush1.msra.mxu0 0.0
        %582 = vmatprep.subr.mxu0 0.0
        %583 = vmatpush1.msra.mxu0 0.0
        %584 = vmatprep.subr.mxu0 0.0
        %585 = vmatpush1.msra.mxu0 0.0
        %586 = vmatprep.subr.mxu0 0.0
        %587 = vmatpush1.msra.mxu0 0.0
        %588 = vmatprep.subr.mxu0 0.0
        %589 = vmatpush1.msra.mxu0 0.0
        %590 = vmatprep.subr.mxu0 0.0
        %591 = vmatpush1.msra.mxu0 0.0
        %592 = vmatprep.subr.mxu0 0.0
        %593 = vmatpush1.msra.mxu0 0.0
        %594 = vmatprep.subr.mxu0 0.0
        %595 = vmatpush1.msra.mxu0 0.0
        %596 = vmatprep.subr.mxu0 0.0
        %597 = vmatpush1.msra.mxu0 0.0
        %598 = vmatprep.subr.mxu0 0.0
        %599 = vmatpush1.msra.mxu0 0.0
        %600 = vmatprep.mubr.f32.mxu0 0.0
        %v601 = vand.u32 %v141, 4294901760
        %v602 = vsub.f32 %v141, %v601
        %603 = vmatmul.mubr.f32.gmra.mrb[0].mxu0 %v602
        %v604 = vpop.f32.mrb[0].mxu0
        %v605 = vadd.f32 %v483, %v604
        %v606 = vpop.f32.mrb[0].mxu0
        %607 = vmatprep.mubr.f32.mxu0 0.0
        %v608 = vand.u32 %v142, 4294901760
        %v609 = vsub.f32 %v142, %v608
        %610 = vmatmul.mubr.f32.gmra.mrb[0].mxu0 %v609
        %v611 = vpop.f32.mrb[0].mxu0
        %v612 = vadd.f32 %v489, %v611
        %v613 = vpop.f32.mrb[0].mxu0
        %614 = vmatprep.mubr.f32.mxu0 0.0
        %v615 = vand.u32 %v143, 4294901760
        %v616 = vsub.f32 %v143, %v615
        %617 = vmatmul.mubr.f32.gmra.mrb[0].mxu0 %v616
        %v618 = vpop.f32.mrb[0].mxu0
        %v619 = vadd.f32 %v495, %v618
        %v620 = vpop.f32.mrb[0].mxu0
        %621 = vmatprep.mubr.f32.mxu0 0.0
        %v622 = vand.u32 %v144, 4294901760
        %v623 = vsub.f32 %v144, %v622
        %624 = vmatmul.mubr.f32.gmra.mrb[0].mxu0 %v623
        %v625 = vpop.f32.mrb[0].mxu0
        %v626 = vadd.f32 %v501, %v625
        %v627 = vpop.f32.mrb[0].mxu0
        %628 = vdwg.mxu0
        %629 = vmatprep.subr.mxu0 0.0
        %v630 = vand.u32 %v198, 4294901760
        %631 = vmatpush1.msra.mxu0 %v630
        %632 = vmatprep.subr.mxu0 0.0
        %v633 = vand.u32 %v199, 4294901760
        %634 = vmatpush1.msra.mxu0 %v633
        %635 = vmatprep.subr.mxu0 0.0
        %v636 = vand.u32 %v200, 4294901760
        %637 = vmatpush1.msra.mxu0 %v636
        %638 = vmatprep.subr.mxu0 0.0
        %v639 = vand.u32 %v201, 4294901760
        %640 = vmatpush1.msra.mxu0 %v639
        %641 = vmatprep.subr.mxu0 0.0
        %v642 = vand.u32 %v202, 4294901760
        %643 = vmatpush1.msra.mxu0 %v642
        %644 = vmatprep.subr.mxu0 0.0
        %v645 = vand.u32 %v203, 4294901760
        %646 = vmatpush1.msra.mxu0 %v645
        %647 = vmatprep.subr.mxu0 0.0
        %v648 = vand.u32 %v204, 4294901760
        %649 = vmatpush1.msra.mxu0 %v648
        %650 = vmatprep.subr.mxu0 0.0
        %v651 = vand.u32 %v205, 4294901760
        %652 = vmatpush1.msra.mxu0 %v651
        %653 = vmatprep.subr.mxu0 0.0
        %v654 = vand.u32 %v206, 4294901760
        %655 = vmatpush1.msra.mxu0 %v654
        %656 = vmatprep.subr.mxu0 0.0
        %v657 = vand.u32 %v207, 4294901760
        %658 = vmatpush1.msra.mxu0 %v657
        %659 = vmatprep.subr.mxu0 0.0
        %v660 = vand.u32 %v208, 4294901760
        %661 = vmatpush1.msra.mxu0 %v660
        %662 = vmatprep.subr.mxu0 0.0
        %v663 = vand.u32 %v209, 4294901760
        %664 = vmatpush1.msra.mxu0 %v663
        %665 = vmatprep.subr.mxu0 0.0
        %v666 = vand.u32 %v210, 4294901760
        %667 = vmatpush1.msra.mxu0 %v666
        %668 = vmatprep.subr.mxu0 0.0
        %v669 = vand.u32 %v211, 4294901760
        %670 = vmatpush1.msra.mxu0 %v669
        %671 = vmatprep.subr.mxu0 0.0
        %v672 = vand.u32 %v212, 4294901760
        %673 = vmatpush1.msra.mxu0 %v672
        %674 = vmatprep.subr.mxu0 0.0
        %v675 = vand.u32 %v213, 4294901760
        %676 = vmatpush1.msra.mxu0 %v675
        %677 = vmatprep.subr.mxu0 0.0
        %678 = vmatpush1.msra.mxu0 0.0
        %679 = vmatprep.subr.mxu0 0.0
        %680 = vmatpush1.msra.mxu0 0.0
        %681 = vmatprep.subr.mxu0 0.0
        %682 = vmatpush1.msra.mxu0 0.0
        %683 = vmatprep.subr.mxu0 0.0
        %684 = vmatpush1.msra.mxu0 0.0
        %685 = vmatprep.subr.mxu0 0.0
        %686 = vmatpush1.msra.mxu0 0.0
        %687 = vmatprep.subr.mxu0 0.0
        %688 = vmatpush1.msra.mxu0 0.0
        %689 = vmatprep.subr.mxu0 0.0
        %690 = vmatpush1.msra.mxu0 0.0
        %691 = vmatprep.subr.mxu0 0.0
        %692 = vmatpush1.msra.mxu0 0.0
        %693 = vmatprep.subr.mxu0 0.0
        %694 = vmatpush1.msra.mxu0 0.0
        %695 = vmatprep.subr.mxu0 0.0
        %696 = vmatpush1.msra.mxu0 0.0
        %697 = vmatprep.subr.mxu0 0.0
        %698 = vmatpush1.msra.mxu0 0.0
        %699 = vmatprep.subr.mxu0 0.0
        %700 = vmatpush1.msra.mxu0 0.0
        %701 = vmatprep.subr.mxu0 0.0
        %702 = vmatpush1.msra.mxu0 0.0
        %703 = vmatprep.subr.mxu0 0.0
        %704 = vmatpush1.msra.mxu0 0.0
        %705 = vmatprep.subr.mxu0 0.0
        %706 = vmatpush1.msra.mxu0 0.0
        %707 = vmatprep.subr.mxu0 0.0
        %708 = vmatpush1.msra.mxu0 0.0
        %709 = vmatprep.mubr.f32.mxu0 0.0
        %v710 = vand.u32 %v141, 4294901760
        %v711 = vsub.f32 %v141, %v710
        %v712 = vand.u32 %v711, 4294901760
        %713 = vmatmul.mubr.f32.gmra.mrb[0].mxu0 %v712
        %v714 = vpop.f32.mrb[0].mxu0
        %v715 = vadd.f32 %v605, %v714
        %v716 = vpop.f32.mrb[0].mxu0
        %717 = vmatprep.mubr.f32.mxu0 0.0
        %v718 = vand.u32 %v142, 4294901760
        %v719 = vsub.f32 %v142, %v718
        %v720 = vand.u32 %v719, 4294901760
        %721 = vmatmul.mubr.f32.gmra.mrb[0].mxu0 %v720
        %v722 = vpop.f32.mrb[0].mxu0
        %v723 = vadd.f32 %v612, %v722
        %v724 = vpop.f32.mrb[0].mxu0
        %725 = vmatprep.mubr.f32.mxu0 0.0
        %v726 = vand.u32 %v143, 4294901760
        %v727 = vsub.f32 %v143, %v726
        %v728 = vand.u32 %v727, 4294901760
        %729 = vmatmul.mubr.f32.gmra.mrb[0].mxu0 %v728
        %v730 = vpop.f32.mrb[0].mxu0
        %v731 = vadd.f32 %v619, %v730
        %v732 = vpop.f32.mrb[0].mxu0
        %733 = vmatprep.mubr.f32.mxu0 0.0
        %v734 = vand.u32 %v144, 4294901760
        %v735 = vsub.f32 %v144, %v734
        %v736 = vand.u32 %v735, 4294901760
        %737 = vmatmul.mubr.f32.gmra.mrb[0].mxu0 %v736
        %v738 = vpop.f32.mrb[0].mxu0
        %v739 = vadd.f32 %v626, %v738
        %v740 = vpop.f32.mrb[0].mxu0
        %741 = vdwg.mxu0
        %742 = vmatprep.subr.mxu0 0.0
        %v743 = vand.u32 %v198, 4294901760
        %v744 = vsub.f32 %v198, %v743
        %v745 = vand.u32 %v744, 4294901760
        %746 = vmatpush1.msra.mxu0 %v745
        %747 = vmatprep.subr.mxu0 0.0
        %v748 = vand.u32 %v199, 4294901760
        %v749 = vsub.f32 %v199, %v748
        %v750 = vand.u32 %v749, 4294901760
        %751 = vmatpush1.msra.mxu0 %v750
        %752 = vmatprep.subr.mxu0 0.0
        %v753 = vand.u32 %v200, 4294901760
        %v754 = vsub.f32 %v200, %v753
        %v755 = vand.u32 %v754, 4294901760
        %756 = vmatpush1.msra.mxu0 %v755
        %757 = vmatprep.subr.mxu0 0.0
        %v758 = vand.u32 %v201, 4294901760
        %v759 = vsub.f32 %v201, %v758
        %v760 = vand.u32 %v759, 4294901760
        %761 = vmatpush1.msra.mxu0 %v760
        %762 = vmatprep.subr.mxu0 0.0
        %v763 = vand.u32 %v202, 4294901760
        %v764 = vsub.f32 %v202, %v763
        %v765 = vand.u32 %v764, 4294901760
        %766 = vmatpush1.msra.mxu0 %v765
        %767 = vmatprep.subr.mxu0 0.0
        %v768 = vand.u32 %v203, 4294901760
        %v769 = vsub.f32 %v203, %v768
        %v770 = vand.u32 %v769, 4294901760
        %771 = vmatpush1.msra.mxu0 %v770
        %772 = vmatprep.subr.mxu0 0.0
        %v773 = vand.u32 %v204, 4294901760
        %v774 = vsub.f32 %v204, %v773
        %v775 = vand.u32 %v774, 4294901760
        %776 = vmatpush1.msra.mxu0 %v775
        %777 = vmatprep.subr.mxu0 0.0
        %v778 = vand.u32 %v205, 4294901760
        %v779 = vsub.f32 %v205, %v778
        %v780 = vand.u32 %v779, 4294901760
        %781 = vmatpush1.msra.mxu0 %v780
        %782 = vmatprep.subr.mxu0 0.0
        %v783 = vand.u32 %v206, 4294901760
        %v784 = vsub.f32 %v206, %v783
        %v785 = vand.u32 %v784, 4294901760
        %786 = vmatpush1.msra.mxu0 %v785
        %787 = vmatprep.subr.mxu0 0.0
        %v788 = vand.u32 %v207, 4294901760
        %v789 = vsub.f32 %v207, %v788
        %v790 = vand.u32 %v789, 4294901760
        %791 = vmatpush1.msra.mxu0 %v790
        %792 = vmatprep.subr.mxu0 0.0
        %v793 = vand.u32 %v208, 4294901760
        %v794 = vsub.f32 %v208, %v793
        %v795 = vand.u32 %v794, 4294901760
        %796 = vmatpush1.msra.mxu0 %v795
        %797 = vmatprep.subr.mxu0 0.0
        %v798 = vand.u32 %v209, 4294901760
        %v799 = vsub.f32 %v209, %v798
        %v800 = vand.u32 %v799, 4294901760
        %801 = vmatpush1.msra.mxu0 %v800
        %802 = vmatprep.subr.mxu0 0.0
        %v803 = vand.u32 %v210, 4294901760
        %v804 = vsub.f32 %v210, %v803
        %v805 = vand.u32 %v804, 4294901760
        %806 = vmatpush1.msra.mxu0 %v805
        %807 = vmatprep.subr.mxu0 0.0
        %v808 = vand.u32 %v211, 4294901760
        %v809 = vsub.f32 %v211, %v808
        %v810 = vand.u32 %v809, 4294901760
        %811 = vmatpush1.msra.mxu0 %v810
        %812 = vmatprep.subr.mxu0 0.0
        %v813 = vand.u32 %v212, 4294901760
        %v814 = vsub.f32 %v212, %v813
        %v815 = vand.u32 %v814, 4294901760
        %816 = vmatpush1.msra.mxu0 %v815
        %817 = vmatprep.subr.mxu0 0.0
        %v818 = vand.u32 %v213, 4294901760
        %v819 = vsub.f32 %v213, %v818
        %v820 = vand.u32 %v819, 4294901760
        %821 = vmatpush1.msra.mxu0 %v820
        %822 = vmatprep.subr.mxu0 0.0
        %823 = vmatpush1.msra.mxu0 0.0
        %824 = vmatprep.subr.mxu0 0.0
        %825 = vmatpush1.msra.mxu0 0.0
        %826 = vmatprep.subr.mxu0 0.0
        %827 = vmatpush1.msra.mxu0 0.0
        %828 = vmatprep.subr.mxu0 0.0
        %829 = vmatpush1.msra.mxu0 0.0
        %830 = vmatprep.subr.mxu0 0.0
        %831 = vmatpush1.msra.mxu0 0.0
        %832 = vmatprep.subr.mxu0 0.0
        %833 = vmatpush1.msra.mxu0 0.0
        %834 = vmatprep.subr.mxu0 0.0
        %835 = vmatpush1.msra.mxu0 0.0
        %836 = vmatprep.subr.mxu0 0.0
        %837 = vmatpush1.msra.mxu0 0.0
        %838 = vmatprep.subr.mxu0 0.0
        %839 = vmatpush1.msra.mxu0 0.0
        %840 = vmatprep.subr.mxu0 0.0
        %841 = vmatpush1.msra.mxu0 0.0
        %842 = vmatprep.subr.mxu0 0.0
        %843 = vmatpush1.msra.mxu0 0.0
        %844 = vmatprep.subr.mxu0 0.0
        %845 = vmatpush1.msra.mxu0 0.0
        %846 = vmatprep.subr.mxu0 0.0
        %847 = vmatpush1.msra.mxu0 0.0
        %848 = vmatprep.subr.mxu0 0.0
        %849 = vmatpush1.msra.mxu0 0.0
        %850 = vmatprep.subr.mxu0 0.0
        %851 = vmatpush1.msra.mxu0 0.0
        %852 = vmatprep.subr.mxu0 0.0
        %853 = vmatpush1.msra.mxu0 0.0
        %854 = vmatprep.mubr.f32.mxu0 0.0
        %v855 = vand.u32 %v141, 4294901760
        %856 = vmatmul.mubr.f32.gmra.mrb[0].mxu0 %v855
        %v857 = vpop.f32.mrb[0].mxu0
        %v858 = vadd.f32 %v715, %v857
        %v859 = vpop.f32.mrb[0].mxu0
        %860 = vmatprep.mubr.f32.mxu0 0.0
        %v861 = vand.u32 %v142, 4294901760
        %862 = vmatmul.mubr.f32.gmra.mrb[0].mxu0 %v861
        %v863 = vpop.f32.mrb[0].mxu0
        %v864 = vadd.f32 %v723, %v863
        %v865 = vpop.f32.mrb[0].mxu0
        %866 = vmatprep.mubr.f32.mxu0 0.0
        %v867 = vand.u32 %v143, 4294901760
        %868 = vmatmul.mubr.f32.gmra.mrb[0].mxu0 %v867
        %v869 = vpop.f32.mrb[0].mxu0
        %v870 = vadd.f32 %v731, %v869
        %v871 = vpop.f32.mrb[0].mxu0
        %872 = vmatprep.mubr.f32.mxu0 0.0
        %v873 = vand.u32 %v144, 4294901760
        %874 = vmatmul.mubr.f32.gmra.mrb[0].mxu0 %v873
        %v875 = vpop.f32.mrb[0].mxu0
        %v876 = vadd.f32 %v739, %v875
        %v877 = vpop.f32.mrb[0].mxu0
        %878 = vdwg.mxu0
        %879 = vmatprep.subr.mxu0 0.0
        %v880 = vand.u32 %v198, 4294901760
        %881 = vmatpush1.msra.mxu0 %v880
        %882 = vmatprep.subr.mxu0 0.0
        %v883 = vand.u32 %v199, 4294901760
        %884 = vmatpush1.msra.mxu0 %v883
        %885 = vmatprep.subr.mxu0 0.0
        %v886 = vand.u32 %v200, 4294901760
        %887 = vmatpush1.msra.mxu0 %v886
        %888 = vmatprep.subr.mxu0 0.0
        %v889 = vand.u32 %v201, 4294901760
        %890 = vmatpush1.msra.mxu0 %v889
        %891 = vmatprep.subr.mxu0 0.0
        %v892 = vand.u32 %v202, 4294901760
        %893 = vmatpush1.msra.mxu0 %v892
        %894 = vmatprep.subr.mxu0 0.0
        %v895 = vand.u32 %v203, 4294901760
        %896 = vmatpush1.msra.mxu0 %v895
        %897 = vmatprep.subr.mxu0 0.0
        %v898 = vand.u32 %v204, 4294901760
        %899 = vmatpush1.msra.mxu0 %v898
        %900 = vmatprep.subr.mxu0 0.0
        %v901 = vand.u32 %v205, 4294901760
        %902 = vmatpush1.msra.mxu0 %v901
        %903 = vmatprep.subr.mxu0 0.0
        %v904 = vand.u32 %v206, 4294901760
        %905 = vmatpush1.msra.mxu0 %v904
        %906 = vmatprep.subr.mxu0 0.0
        %v907 = vand.u32 %v207, 4294901760
        %908 = vmatpush1.msra.mxu0 %v907
        %909 = vmatprep.subr.mxu0 0.0
        %v910 = vand.u32 %v208, 4294901760
        %911 = vmatpush1.msra.mxu0 %v910
        %912 = vmatprep.subr.mxu0 0.0
        %v913 = vand.u32 %v209, 4294901760
        %914 = vmatpush1.msra.mxu0 %v913
        %915 = vmatprep.subr.mxu0 0.0
        %v916 = vand.u32 %v210, 4294901760
        %917 = vmatpush1.msra.mxu0 %v916
        %918 = vmatprep.subr.mxu0 0.0
        %v919 = vand.u32 %v211, 4294901760
        %920 = vmatpush1.msra.mxu0 %v919
        %921 = vmatprep.subr.mxu0 0.0
        %v922 = vand.u32 %v212, 4294901760
        %923 = vmatpush1.msra.mxu0 %v922
        %924 = vmatprep.subr.mxu0 0.0
        %v925 = vand.u32 %v213, 4294901760
        %926 = vmatpush1.msra.mxu0 %v925
        %927 = vmatprep.subr.mxu0 0.0
        %928 = vmatpush1.msra.mxu0 0.0
        %929 = vmatprep.subr.mxu0 0.0
        %930 = vmatpush1.msra.mxu0 0.0
        %931 = vmatprep.subr.mxu0 0.0
        %932 = vmatpush1.msra.mxu0 0.0
        %933 = vmatprep.subr.mxu0 0.0
        %934 = vmatpush1.msra.mxu0 0.0
        %935 = vmatprep.subr.mxu0 0.0
        %936 = vmatpush1.msra.mxu0 0.0
        %937 = vmatprep.subr.mxu0 0.0
        %938 = vmatpush1.msra.mxu0 0.0
        %939 = vmatprep.subr.mxu0 0.0
        %940 = vmatpush1.msra.mxu0 0.0
        %941 = vmatprep.subr.mxu0 0.0
        %942 = vmatpush1.msra.mxu0 0.0
        %943 = vmatprep.subr.mxu0 0.0
        %944 = vmatpush1.msra.mxu0 0.0
        %945 = vmatprep.subr.mxu0 0.0
        %946 = vmatpush1.msra.mxu0 0.0
        %947 = vmatprep.subr.mxu0 0.0
        %948 = vmatpush1.msra.mxu0 0.0
        %949 = vmatprep.subr.mxu0 0.0
        %950 = vmatpush1.msra.mxu0 0.0
        %951 = vmatprep.subr.mxu0 0.0
        %952 = vmatpush1.msra.mxu0 0.0
        %953 = vmatprep.subr.mxu0 0.0
        %954 = vmatpush1.msra.mxu0 0.0
        %955 = vmatprep.subr.mxu0 0.0
        %956 = vmatpush1.msra.mxu0 0.0
        %957 = vmatprep.subr.mxu0 0.0
        %958 = vmatpush1.msra.mxu0 0.0
        %959 = vmatprep.mubr.f32.mxu0 0.0
        %v960 = vand.u32 %v141, 4294901760
        %961 = vmatmul.mubr.f32.gmra.mrb[0].mxu0 %v960
        %v962 = vpop.f32.mrb[0].mxu0
        %v963 = vadd.f32 %v858, %v962
        %v964 = vpop.f32.mrb[0].mxu0
        %965 = vmatprep.mubr.f32.mxu0 0.0
        %v966 = vand.u32 %v142, 4294901760
        %967 = vmatmul.mubr.f32.gmra.mrb[0].mxu0 %v966
        %v968 = vpop.f32.mrb[0].mxu0
        %v969 = vadd.f32 %v864, %v968
        %v970 = vpop.f32.mrb[0].mxu0
        %971 = vmatprep.mubr.f32.mxu0 0.0
        %v972 = vand.u32 %v143, 4294901760
        %973 = vmatmul.mubr.f32.gmra.mrb[0].mxu0 %v972
        %v974 = vpop.f32.mrb[0].mxu0
        %v975 = vadd.f32 %v870, %v974
        %v976 = vpop.f32.mrb[0].mxu0
        %977 = vmatprep.mubr.f32.mxu0 0.0
        %v978 = vand.u32 %v144, 4294901760
        %979 = vmatmul.mubr.f32.gmra.mrb[0].mxu0 %v978
        %v980 = vpop.f32.mrb[0].mxu0
        %v981 = vadd.f32 %v876, %v980
        %v982 = vpop.f32.mrb[0].mxu0
        %983 = vdwg.mxu0
        %vm984 = vcmask 261120
        %985 = vst.msk [vmem:[%s139] sm:$0xff] %vm984, %v963
        %986 = vst.msk [vmem:[%s139 + $0x8] sm:$0xff] %vm984, %v969
        %987 = vst.msk [vmem:[%s139 + $0x10] sm:$0xff] %vm984, %v975
        %988 = vst.msk [vmem:[%s139 + $0x18] sm:$0xff] %vm984, %v981
        %s989 = smul.u32 4, %s15
        %p990 = scmp.lt.s32.totalorder %s989, 7
        %s991 = scalar_select %p990, %s989, 7
        %s992 = smul.addr %s991, 8
        %s993 = scalar_lea.vmem %s1, %s992
        // Predicated region
        $region29: #{tpu_custom_call.1} parent=23 // pred_check
          %p994 = pneg %p59
        $region30: #{tpu_custom_call.1} parent=23 // pred_check_branch
          %996 = sbr.rel (%p994) target = $region32
        $region31: #{tpu_custom_call.1} parent=23 // pred_region
          %s997 = smul.u32 4, %s15
        $region32: #{tpu_custom_call.1} parent=23 // pred_fallthru
          _
      $region24: #{tpu_custom_call.1} parent=5 // pred_fallthru
        _
      %p998 = scmp.le.s32.totalorder 2, %s10
      // Predicated region
      $region33: #{tpu_custom_call.1} parent=5 // pred_check
        %p999 = pneg %p998
      $region34: #{tpu_custom_call.1} parent=5 // pred_check_branch
        %1001 = sbr.rel (%p999) target = $region36
      $region35: #{tpu_custom_call.1} parent=5 // pred_region
        %s1002 = ssub.s32 %s10, 2
        // Predicated region
        $region37: #{tpu_custom_call.1} parent=35 // pred_check
          %p1003 = pneg %p65
        $region38: #{tpu_custom_call.1} parent=35 // pred_check_branch
          %1005 = sbr.rel (%p1003) target = $region40
        $region39: #{tpu_custom_call.1} parent=35 // pred_region
          %s1006 = smul.u32 4, %s16
          %p1007 = scmp.lt.s32.totalorder %s1006, 7
          %s1008 = scalar_select %p1007, %s1006, 7
          %s1009 = smul.addr %s1008, 8
          %s1010 = scalar_lea.vmem %s1, %s1009
        $region40: #{tpu_custom_call.1} parent=35 // pred_fallthru
          _
      $region36: #{tpu_custom_call.1} parent=5 // pred_fallthru
        _
    $region6: #{tpu_custom_call.1} parent=1 // loop_footer
      %s14 = sadd.s32 1, %s10
    $region7: #{tpu_custom_call.1} parent=1 // loop_footer_branch
      %9 = sbr.rel target = $region3
    $region8: #{tpu_custom_call.1} parent=1 // loop_exit
      _
    %1011 = vsyncpa [#allocation3], 1
    %s1012 = scalar_lea.sflag [#allocation3], 1
    %1013 = vsyncpa %s1012, 1

// kernel: tpu_custom_call.1
$region0: #{tpu_custom_call.1}
  #allocation0 [shape = 'u32[]', space=smem, size = 0x4, offset = 0x4, fixed_abs, tag = 'smem constant byte address 0x4 - core index']
  #allocation1 [shape = 'u32[144,128]{1,0:T(1,128)}', space=vmem, size = 0x12000, scoped, tag = 'internal scratch']
  %s0 = inlined_call_operand.hbm [shape: f32[64,512], index: 0, kind: input, shape index: {}]
  %s1 = inlined_call_operand.vmem [shape: f32[64,32], index: 1, kind: output, shape index: {}]
  %s2 = sld [smem:[#allocation0]]
  $region41: #{tpu_custom_call.1} parent=0
    _
  %s4 = ssub.s32 1, %s2
  %s5 = scalar_select 0, %s4, %s2
  $region1: #{tpu_custom_call.1} parent=0
    #allocation2 [shape = 'u8[131072]{0}', space=vmem, size = 0x20000, scoped, tag = 'input window, operand 0']
    #allocation3 [shape = 's32[2]{0}', space=sflag, size = 0x8, scoped, tag = 'scoped memory for tpu_custom_call.1']
    %6 = vsyncpa [#allocation3], 0
    %s7 = scalar_lea.sflag [#allocation3], 1
    %8 = vsyncpa %s7, 0
    loop: start=0, step=1, limit=4
    $region2: #{tpu_custom_call.1} parent=1 // loop_pre_header
      _
    $region3: #{tpu_custom_call.1} parent=1 // loop_header
      %s10 = sphi 0, %s14
      %p11 = scmp.ge.s32.totalorder %s10, 4
      %s20 = sphi 0, %s22
      %s23 = sphi 0, %s20
      %s24 = sphi 0, %s23
      %s40 = sphi 0, %s24
      %s46 = sphi 0, %s48
      %s49 = sphi 0, %s46
      %s50 = sphi 0, %s49
      %s66 = sphi 0, %s50
    $region4: #{tpu_custom_call.1} parent=1 // loop_header_branch
      %13 = sbr.rel (%p11) target = $region8
    $region5: #{tpu_custom_call.1} parent=1 // loop_body
      %s15 = ssub.s32 %s10, 1
      %s16 = ssub.s32 %s10, 2
      %s17 = sadd.s32 %s10, 1
      %s18 = ssub.s32 %s10, %s17
      %p19 = scmp.eq.s32.totalorder %s18, 0
      %s21 = sadd.s32 %s20, 1
      %s22 = scalar_select %p19, %s20, %s21
      %p25 = pneg %p19
      %p26 = scmp.eq.s32.totalorder %s10, 1
      %p27 = por %p25, %p26
      %p28 = scmp.ne.s32.totalorder %s20, %s23
      %p29 = scmp.eq.s32.totalorder %s10, 0
      %p30 = por %p28, %p29
      %p31 = scmp.ne.s32.totalorder %s20, %s23
      %p32 = scmp.eq.s32.totalorder %s15, 1
      %p33 = por %p31, %p32
      %p34 = scmp.ne.s32.totalorder %s23, %s24
      %p35 = scmp.eq.s32.totalorder %s15, 0
      %p36 = por %p34, %p35
      %p37 = scmp.ne.s32.totalorder %s23, %s24
      %p38 = scmp.eq.s32.totalorder %s16, 1
      %p39 = por %p37, %p38
      %p41 = scmp.ne.s32.totalorder %s24, %s40
      %p42 = scmp.eq.s32.totalorder %s16, 0
      %p43 = por %p41, %p42
      %s44 = ssub.s32 %s10, %s17
      %p45 = scmp.eq.s32.totalorder %s44, 0
      %s47 = sadd.s32 %s46, 1
      %s48 = scalar_select %p45, %s46, %s47
      %p51 = pneg %p45
      %p52 = scmp.eq.s32.totalorder %s10, 1
      %p53 = por %p51, %p52
      %p54 = scmp.ne.s32.totalorder %s46, %s49
      %p55 = scmp.eq.s32.totalorder %s10, 0
      %p56 = por %p54, %p55
      %p57 = scmp.ne.s32.totalorder %s46, %s49
      %p58 = scmp.eq.s32.totalorder %s15, 1
      %p59 = por %p57, %p58
      %p60 = scmp.ne.s32.totalorder %s49, %s50
      %p61 = scmp.eq.s32.totalorder %s15, 0
      %p62 = por %p60, %p61
      %p63 = scmp.ne.s32.totalorder %s49, %s50
      %p64 = scmp.eq.s32.totalorder %s16, 1
      %p65 = por %p63, %p64
      %p67 = scmp.ne.s32.totalorder %s50, %s66
      %p68 = scmp.eq.s32.totalorder %s16, 0
      %p69 = por %p67, %p68
      %p70 = scmp.le.s32.totalorder 1, %s10
      %p71 = scmp.lt.s32.totalorder %s10, 3
      %p72 = pnand %p70, %p71
      %p73 = pneg %p72
      // Predicated region
      $region9: #{tpu_custom_call.1} parent=5 // pred_check
        _
      $region10: #{tpu_custom_call.1} parent=5 // pred_check_branch
        %75 = sbr.rel (%p72) target = $region12
      $region11: #{tpu_custom_call.1} parent=5 // pred_region
        %s76 = ssub.s32 %s10, 1
      $region12: #{tpu_custom_call.1} parent=5 // pred_fallthru
        _
      %p77 = scmp.lt.s32.totalorder %s10, 2
      // Predicated region
      $region13: #{tpu_custom_call.1} parent=5 // pred_check
        %p78 = pneg %p77
      $region14: #{tpu_custom_call.1} parent=5 // pred_check_branch
        %80 = sbr.rel (%p78) target = $region16
      $region15: #{tpu_custom_call.1} parent=5 // pred_region
        // Predicated region
        $region17: #{tpu_custom_call.1} parent=15 // pred_check
          %p81 = pneg %p30
        $region18: #{tpu_custom_call.1} parent=15 // pred_check_branch
          %83 = sbr.rel (%p81) target = $region20
        $region19: #{tpu_custom_call.1} parent=15 // pred_region
          %s84 = sand.u32 %s20, 1
          %s85 = scalar_lea.sflag [#allocation3], %s84
          %s86 = sand.u32 %s20, 1
          %s87 = smul.addr %s86, 128
          %s88 = scalar_lea.vmem [#allocation2], %s87
          %s89 = smul.u32 4, %s10
          %s91 = ssub.s32 2048, 2048
          %92 = vsyncadd %s85, %s91
          %s93 = smul.addr %s89, 4
          %s94 = smul.addr %s93, 128
          %s95 = scalar_lea.hbm %s0, %s94
          %s96 = sshll.u32 %s88, 4
          %s97 = int_to_ptr.vmem [resolvable:$true] %s96
          %102 = dma.hbm_to_vmem [thread:$0]  %s95, 2048, %s97, %s85, 512, 512, 32
        $region20: #{tpu_custom_call.1} parent=15 // pred_fallthru
          _
      $region16: #{tpu_custom_call.1} parent=5 // pred_fallthru
        _
      %p103 = scmp.le.s32.totalorder 1, %s10
      %p104 = scmp.lt.s32.totalorder %s10, 3
      %p105 = pnand %p103, %p104
      %p106 = pneg %p105
      // Predicated region
      $region21: #{tpu_custom_call.1} parent=5 // pred_check
        _
      $region22: #{tpu_custom_call.1} parent=5 // pred_check_branch
        %108 = sbr.rel (%p105) target = $region24
      $region23: #{tpu_custom_call.1} parent=5 // pred_region
        %s109 = ssub.s32 %s10, 1
        %s110 = sand.u32 %s23, 1
        %s111 = scalar_lea.sflag [#allocation3], %s110
        %s112 = sand.u32 %s23, 1
        %s113 = smul.addr %s112, 128
        %s114 = scalar_lea.vmem [#allocation2], %s113
        // Predicated region
        $region25: #{tpu_custom_call.1} parent=23 // pred_check
          %p115 = pneg %p36
        $region26: #{tpu_custom_call.1} parent=23 // pred_check_branch
          %117 = sbr.rel (%p115) target = $region28
        $region27: #{tpu_custom_call.1} parent=23 // pred_region
          %118 = dma.done %s111, 2048
        $region28: #{tpu_custom_call.1} parent=23 // pred_fallthru
          _
        %s119 = sand.u32 %s23, 1
        %s120 = scalar_lea.sflag [#allocation3], %s119
        %s121 = sand.u32 %s23, 1
        %s122 = smul.addr %s121, 128
        %s123 = scalar_lea.vmem [#allocation2], %s122
        %p124 = pneg %p36
        %p125 = pneg %p33
        %p126 = pneg %p62
        %p127 = pneg %p59
        %s128 = smul.u32 4, %s15
        %p129 = scmp.lt.s32.totalorder %s128, 7
        %s130 = scalar_select %p129, %s128, 7
        %s131 = smul.addr %s130, 8
        %s132 = scalar_lea.vmem %s1, %s131
        %s133 = smul.u32 4, %s15
        %s134 = smul.u32 4, %s15
        %p135 = scmp.lt.s32.totalorder %s134, 7
        %s136 = scalar_select %p135, %s134, 7
        %s137 = smul.addr %s136, 8
        %s138 = scalar_lea.vmem %s1, %s137
        %s139 = smul.u32 4, %s15
        %v140 = vld [vmem:[%s114 + $0x18] sm:$0xff]
        %v141 = vld [vmem:[%s114 + $0x38] sm:$0xff]
        %v142 = vld [vmem:[%s114 + $0x58] sm:$0xff]
        %v143 = vld [vmem:[%s114 + $0x78] sm:$0xff]
        %v144 = vlaneseq
        %v145 = vshrl.u32 %v144, 7
        %v146 = vadd.s32 %v145, 8
        %v147 = vadd.s32 %v145, 16
        %v148 = vadd.s32 %v145, 24
        %v149 = vadd.s32 %v145, 32
        %v150 = vadd.s32 %v145, 40
        %v151 = vadd.s32 %v145, 48
        %v152 = vadd.s32 %v145, 56
        %v153 = vadd.s32 %v145, 64
        %v154 = vadd.s32 %v145, 72
        %v155 = vadd.s32 %v145, 80
        %v156 = vadd.s32 %v145, 88
        %v157 = vadd.s32 %v145, 96
        %v158 = vadd.s32 %v145, 104
        %v159 = vadd.s32 %v145, 112
        %v160 = vadd.s32 %v145, 120
        %v161 = vlaneseq
        %v162 = vand.u32 %v161, 127
        %v163 = vmul.u32 %v162, 4
        %v164 = vadd.s32 %v163, 3
        %vm165 = vcmp.eq.s32.totalorder %v145, %v164
        %vm166 = vcmp.eq.s32.totalorder %v146, %v164
        %vm167 = vcmp.eq.s32.totalorder %v147, %v164
        %vm168 = vcmp.eq.s32.totalorder %v148, %v164
        %vm169 = vcmp.eq.s32.totalorder %v149, %v164
        %vm170 = vcmp.eq.s32.totalorder %v150, %v164
        %vm171 = vcmp.eq.s32.totalorder %v151, %v164
        %vm172 = vcmp.eq.s32.totalorder %v152, %v164
        %vm173 = vcmp.eq.s32.totalorder %v153, %v164
        %vm174 = vcmp.eq.s32.totalorder %v154, %v164
        %vm175 = vcmp.eq.s32.totalorder %v155, %v164
        %vm176 = vcmp.eq.s32.totalorder %v156, %v164
        %vm177 = vcmp.eq.s32.totalorder %v157, %v164
        %vm178 = vcmp.eq.s32.totalorder %v158, %v164
        %vm179 = vcmp.eq.s32.totalorder %v159, %v164
        %vm180 = vcmp.eq.s32.totalorder %v160, %v164
        %v181 = vsel %vm165, 1, 0
        %v182 = vsel %vm166, 1, 0
        %v183 = vsel %vm167, 1, 0
        %v184 = vsel %vm168, 1, 0
        %v185 = vsel %vm169, 1, 0
        %v186 = vsel %vm170, 1, 0
        %v187 = vsel %vm171, 1, 0
        %v188 = vsel %vm172, 1, 0
        %v189 = vsel %vm173, 1, 0
        %v190 = vsel %vm174, 1, 0
        %v191 = vsel %vm175, 1, 0
        %v192 = vsel %vm176, 1, 0
        %v193 = vsel %vm177, 1, 0
        %v194 = vsel %vm178, 1, 0
        %v195 = vsel %vm179, 1, 0
        %v196 = vsel %vm180, 1, 0
        %v197 = vcvt.s32.f32 %v181
        %v198 = vcvt.s32.f32 %v182
        %v199 = vcvt.s32.f32 %v183
        %v200 = vcvt.s32.f32 %v184
        %v201 = vcvt.s32.f32 %v185
        %v202 = vcvt.s32.f32 %v186
        %v203 = vcvt.s32.f32 %v187
        %v204 = vcvt.s32.f32 %v188
        %v205 = vcvt.s32.f32 %v189
        %v206 = vcvt.s32.f32 %v190
        %v207 = vcvt.s32.f32 %v191
        %v208 = vcvt.s32.f32 %v192
        %v209 = vcvt.s32.f32 %v193
        %v210 = vcvt.s32.f32 %v194
        %v211 = vcvt.s32.f32 %v195
        %v212 = vcvt.s32.f32 %v196
        %213 = vmatprep.subr.mxu0 0.0
        %v214 = vand.u32 %v197, 4294901760
        %215 = vmatpush1.msra.mxu0 %v214
        %216 = vmatprep.subr.mxu0 0.0
        %v217 = vand.u32 %v198, 4294901760
        %218 = vmatpush1.msra.mxu0 %v217
        %219 = vmatprep.subr.mxu0 0.0
        %v220 = vand.u32 %v199, 4294901760
        %221 = vmatpush1.msra.mxu0 %v220
        %222 = vmatprep.subr.mxu0 0.0
        %v223 = vand.u32 %v200, 4294901760
        %224 = vmatpush1.msra.mxu0 %v223
        %225 = vmatprep.subr.mxu0 0.0
        %v226 = vand.u32 %v201, 4294901760
        %227 = vmatpush1.msra.mxu0 %v226
        %228 = vmatprep.subr.mxu0 0.0
        %v229 = vand.u32 %v202, 4294901760
        %230 = vmatpush1.msra.mxu0 %v229
        %231 = vmatprep.subr.mxu0 0.0
        %v232 = vand.u32 %v203, 4294901760
        %233 = vmatpush1.msra.mxu0 %v232
        %234 = vmatprep.subr.mxu0 0.0
        %v235 = vand.u32 %v204, 4294901760
        %236 = vmatpush1.msra.mxu0 %v235
        %237 = vmatprep.subr.mxu0 0.0
        %v238 = vand.u32 %v205, 4294901760
        %239 = vmatpush1.msra.mxu0 %v238
        %240 = vmatprep.subr.mxu0 0.0
        %v241 = vand.u32 %v206, 4294901760
        %242 = vmatpush1.msra.mxu0 %v241
        %243 = vmatprep.subr.mxu0 0.0
        %v244 = vand.u32 %v207, 4294901760
        %245 = vmatpush1.msra.mxu0 %v244
        %246 = vmatprep.subr.mxu0 0.0
        %v247 = vand.u32 %v208, 4294901760
        %248 = vmatpush1.msra.mxu0 %v247
        %249 = vmatprep.subr.mxu0 0.0
        %v250 = vand.u32 %v209, 4294901760
        %251 = vmatpush1.msra.mxu0 %v250
        %252 = vmatprep.subr.mxu0 0.0
        %v253 = vand.u32 %v210, 4294901760
        %254 = vmatpush1.msra.mxu0 %v253
        %255 = vmatprep.subr.mxu0 0.0
        %v256 = vand.u32 %v211, 4294901760
        %257 = vmatpush1.msra.mxu0 %v256
        %258 = vmatprep.subr.mxu0 0.0
        %v259 = vand.u32 %v212, 4294901760
        %260 = vmatpush1.msra.mxu0 %v259
        %261 = vmatprep.subr.mxu0 0.0
        %262 = vmatpush1.msra.mxu0 0.0
        %263 = vmatprep.subr.mxu0 0.0
        %264 = vmatpush1.msra.mxu0 0.0
        %265 = vmatprep.subr.mxu0 0.0
        %266 = vmatpush1.msra.mxu0 0.0
        %267 = vmatprep.subr.mxu0 0.0
        %268 = vmatpush1.msra.mxu0 0.0
        %269 = vmatprep.subr.mxu0 0.0
        %270 = vmatpush1.msra.mxu0 0.0
        %271 = vmatprep.subr.mxu0 0.0
        %272 = vmatpush1.msra.mxu0 0.0
        %273 = vmatprep.subr.mxu0 0.0
        %274 = vmatpush1.msra.mxu0 0.0
        %275 = vmatprep.subr.mxu0 0.0
        %276 = vmatpush1.msra.mxu0 0.0
        %277 = vmatprep.subr.mxu0 0.0
        %278 = vmatpush1.msra.mxu0 0.0
        %279 = vmatprep.subr.mxu0 0.0
        %280 = vmatpush1.msra.mxu0 0.0
        %281 = vmatprep.subr.mxu0 0.0
        %282 = vmatpush1.msra.mxu0 0.0
        %283 = vmatprep.subr.mxu0 0.0
        %284 = vmatpush1.msra.mxu0 0.0
        %285 = vmatprep.subr.mxu0 0.0
        %286 = vmatpush1.msra.mxu0 0.0
        %287 = vmatprep.subr.mxu0 0.0
        %288 = vmatpush1.msra.mxu0 0.0
        %289 = vmatprep.subr.mxu0 0.0
        %290 = vmatpush1.msra.mxu0 0.0
        %291 = vmatprep.subr.mxu0 0.0
        %292 = vmatpush1.msra.mxu0 0.0
        %293 = vmatprep.mubr.f32.mxu0 0.0
        %v294 = vand.u32 %v140, 4294901760
        %v295 = vsub.f32 %v140, %v294
        %v296 = vand.u32 %v295, 4294901760
        %v297 = vsub.f32 %v295, %v296
        %v298 = vand.u32 %v297, 4294901760
        %299 = vmatmul.mubr.f32.gmra.mrb[0].mxu0 %v298
        %v300 = vpop.f32.mrb[0].mxu0
        %v301 = vadd.f32 0.0, %v300
        %v302 = vpop.f32.mrb[0].mxu0
        %303 = vmatprep.mubr.f32.mxu0 0.0
        %v304 = vand.u32 %v141, 4294901760
        %v305 = vsub.f32 %v141, %v304
        %v306 = vand.u32 %v305, 4294901760
        %v307 = vsub.f32 %v305, %v306
        %v308 = vand.u32 %v307, 4294901760
        %309 = vmatmul.mubr.f32.gmra.mrb[0].mxu0 %v308
        %v310 = vpop.f32.mrb[0].mxu0
        %v311 = vadd.f32 0.0, %v310
        %v312 = vpop.f32.mrb[0].mxu0
        %313 = vmatprep.mubr.f32.mxu0 0.0
        %v314 = vand.u32 %v142, 4294901760
        %v315 = vsub.f32 %v142, %v314
        %v316 = vand.u32 %v315, 4294901760
        %v317 = vsub.f32 %v315, %v316
        %v318 = vand.u32 %v317, 4294901760
        %319 = vmatmul.mubr.f32.gmra.mrb[0].mxu0 %v318
        %v320 = vpop.f32.mrb[0].mxu0
        %v321 = vadd.f32 0.0, %v320
        %v322 = vpop.f32.mrb[0].mxu0
        %323 = vmatprep.mubr.f32.mxu0 0.0
        %v324 = vand.u32 %v143, 4294901760
        %v325 = vsub.f32 %v143, %v324
        %v326 = vand.u32 %v325, 4294901760
        %v327 = vsub.f32 %v325, %v326
        %v328 = vand.u32 %v327, 4294901760
        %329 = vmatmul.mubr.f32.gmra.mrb[0].mxu0 %v328
        %v330 = vpop.f32.mrb[0].mxu0
        %v331 = vadd.f32 0.0, %v330
        %v332 = vpop.f32.mrb[0].mxu0
        %333 = vdwg.mxu0
        %334 = vmatprep.subr.mxu0 0.0
        %v335 = vand.u32 %v197, 4294901760
        %v336 = vsub.f32 %v197, %v335
        %v337 = vand.u32 %v336, 4294901760
        %v338 = vsub.f32 %v336, %v337
        %v339 = vand.u32 %v338, 4294901760
        %340 = vmatpush1.msra.mxu0 %v339
        %341 = vmatprep.subr.mxu0 0.0
        %v342 = vand.u32 %v198, 4294901760
        %v343 = vsub.f32 %v198, %v342
        %v344 = vand.u32 %v343, 4294901760
        %v345 = vsub.f32 %v343, %v344
        %v346 = vand.u32 %v345, 4294901760
        %347 = vmatpush1.msra.mxu0 %v346
        %348 = vmatprep.subr.mxu0 0.0
        %v349 = vand.u32 %v199, 4294901760
        %v350 = vsub.f32 %v199, %v349
        %v351 = vand.u32 %v350, 4294901760
        %v352 = vsub.f32 %v350, %v351
        %v353 = vand.u32 %v352, 4294901760
        %354 = vmatpush1.msra.mxu0 %v353
        %355 = vmatprep.subr.mxu0 0.0
        %v356 = vand.u32 %v200, 4294901760
        %v357 = vsub.f32 %v200, %v356
        %v358 = vand.u32 %v357, 4294901760
        %v359 = vsub.f32 %v357, %v358
        %v360 = vand.u32 %v359, 4294901760
        %361 = vmatpush1.msra.mxu0 %v360
        %362 = vmatprep.subr.mxu0 0.0
        %v363 = vand.u32 %v201, 4294901760
        %v364 = vsub.f32 %v201, %v363
        %v365 = vand.u32 %v364, 4294901760
        %v366 = vsub.f32 %v364, %v365
        %v367 = vand.u32 %v366, 4294901760
        %368 = vmatpush1.msra.mxu0 %v367
        %369 = vmatprep.subr.mxu0 0.0
        %v370 = vand.u32 %v202, 4294901760
        %v371 = vsub.f32 %v202, %v370
        %v372 = vand.u32 %v371, 4294901760
        %v373 = vsub.f32 %v371, %v372
        %v374 = vand.u32 %v373, 4294901760
        %375 = vmatpush1.msra.mxu0 %v374
        %376 = vmatprep.subr.mxu0 0.0
        %v377 = vand.u32 %v203, 4294901760
        %v378 = vsub.f32 %v203, %v377
        %v379 = vand.u32 %v378, 4294901760
        %v380 = vsub.f32 %v378, %v379
        %v381 = vand.u32 %v380, 4294901760
        %382 = vmatpush1.msra.mxu0 %v381
        %383 = vmatprep.subr.mxu0 0.0
        %v384 = vand.u32 %v204, 4294901760
        %v385 = vsub.f32 %v204, %v384
        %v386 = vand.u32 %v385, 4294901760
        %v387 = vsub.f32 %v385, %v386
        %v388 = vand.u32 %v387, 4294901760
        %389 = vmatpush1.msra.mxu0 %v388
        %390 = vmatprep.subr.mxu0 0.0
        %v391 = vand.u32 %v205, 4294901760
        %v392 = vsub.f32 %v205, %v391
        %v393 = vand.u32 %v392, 4294901760
        %v394 = vsub.f32 %v392, %v393
        %v395 = vand.u32 %v394, 4294901760
        %396 = vmatpush1.msra.mxu0 %v395
        %397 = vmatprep.subr.mxu0 0.0
        %v398 = vand.u32 %v206, 4294901760
        %v399 = vsub.f32 %v206, %v398
        %v400 = vand.u32 %v399, 4294901760
        %v401 = vsub.f32 %v399, %v400
        %v402 = vand.u32 %v401, 4294901760
        %403 = vmatpush1.msra.mxu0 %v402
        %404 = vmatprep.subr.mxu0 0.0
        %v405 = vand.u32 %v207, 4294901760
        %v406 = vsub.f32 %v207, %v405
        %v407 = vand.u32 %v406, 4294901760
        %v408 = vsub.f32 %v406, %v407
        %v409 = vand.u32 %v408, 4294901760
        %410 = vmatpush1.msra.mxu0 %v409
        %411 = vmatprep.subr.mxu0 0.0
        %v412 = vand.u32 %v208, 4294901760
        %v413 = vsub.f32 %v208, %v412
        %v414 = vand.u32 %v413, 4294901760
        %v415 = vsub.f32 %v413, %v414
        %v416 = vand.u32 %v415, 4294901760
        %417 = vmatpush1.msra.mxu0 %v416
        %418 = vmatprep.subr.mxu0 0.0
        %v419 = vand.u32 %v209, 4294901760
        %v420 = vsub.f32 %v209, %v419
        %v421 = vand.u32 %v420, 4294901760
        %v422 = vsub.f32 %v420, %v421
        %v423 = vand.u32 %v422, 4294901760
        %424 = vmatpush1.msra.mxu0 %v423
        %425 = vmatprep.subr.mxu0 0.0
        %v426 = vand.u32 %v210, 4294901760
        %v427 = vsub.f32 %v210, %v426
        %v428 = vand.u32 %v427, 4294901760
        %v429 = vsub.f32 %v427, %v428
        %v430 = vand.u32 %v429, 4294901760
        %431 = vmatpush1.msra.mxu0 %v430
        %432 = vmatprep.subr.mxu0 0.0
        %v433 = vand.u32 %v211, 4294901760
        %v434 = vsub.f32 %v211, %v433
        %v435 = vand.u32 %v434, 4294901760
        %v436 = vsub.f32 %v434, %v435
        %v437 = vand.u32 %v436, 4294901760
        %438 = vmatpush1.msra.mxu0 %v437
        %439 = vmatprep.subr.mxu0 0.0
        %v440 = vand.u32 %v212, 4294901760
        %v441 = vsub.f32 %v212, %v440
        %v442 = vand.u32 %v441, 4294901760
        %v443 = vsub.f32 %v441, %v442
        %v444 = vand.u32 %v443, 4294901760
        %445 = vmatpush1.msra.mxu0 %v444
        %446 = vmatprep.subr.mxu0 0.0
        %447 = vmatpush1.msra.mxu0 0.0
        %448 = vmatprep.subr.mxu0 0.0
        %449 = vmatpush1.msra.mxu0 0.0
        %450 = vmatprep.subr.mxu0 0.0
        %451 = vmatpush1.msra.mxu0 0.0
        %452 = vmatprep.subr.mxu0 0.0
        %453 = vmatpush1.msra.mxu0 0.0
        %454 = vmatprep.subr.mxu0 0.0
        %455 = vmatpush1.msra.mxu0 0.0
        %456 = vmatprep.subr.mxu0 0.0
        %457 = vmatpush1.msra.mxu0 0.0
        %458 = vmatprep.subr.mxu0 0.0
        %459 = vmatpush1.msra.mxu0 0.0
        %460 = vmatprep.subr.mxu0 0.0
        %461 = vmatpush1.msra.mxu0 0.0
        %462 = vmatprep.subr.mxu0 0.0
        %463 = vmatpush1.msra.mxu0 0.0
        %464 = vmatprep.subr.mxu0 0.0
        %465 = vmatpush1.msra.mxu0 0.0
        %466 = vmatprep.subr.mxu0 0.0
        %467 = vmatpush1.msra.mxu0 0.0
        %468 = vmatprep.subr.mxu0 0.0
        %469 = vmatpush1.msra.mxu0 0.0
        %470 = vmatprep.subr.mxu0 0.0
        %471 = vmatpush1.msra.mxu0 0.0
        %472 = vmatprep.subr.mxu0 0.0
        %473 = vmatpush1.msra.mxu0 0.0
        %474 = vmatprep.subr.mxu0 0.0
        %475 = vmatpush1.msra.mxu0 0.0
        %476 = vmatprep.subr.mxu0 0.0
        %477 = vmatpush1.msra.mxu0 0.0
        %478 = vmatprep.mubr.f32.mxu0 0.0
        %v479 = vand.u32 %v140, 4294901760
        %480 = vmatmul.mubr.f32.gmra.mrb[0].mxu0 %v479
        %v481 = vpop.f32.mrb[0].mxu0
        %v482 = vadd.f32 %v301, %v481
        %v483 = vpop.f32.mrb[0].mxu0
        %484 = vmatprep.mubr.f32.mxu0 0.0
        %v485 = vand.u32 %v141, 4294901760
        %486 = vmatmul.mubr.f32.gmra.mrb[0].mxu0 %v485
        %v487 = vpop.f32.mrb[0].mxu0
        %v488 = vadd.f32 %v311, %v487
        %v489 = vpop.f32.mrb[0].mxu0
        %490 = vmatprep.mubr.f32.mxu0 0.0
        %v491 = vand.u32 %v142, 4294901760
        %492 = vmatmul.mubr.f32.gmra.mrb[0].mxu0 %v491
        %v493 = vpop.f32.mrb[0].mxu0
        %v494 = vadd.f32 %v321, %v493
        %v495 = vpop.f32.mrb[0].mxu0
        %496 = vmatprep.mubr.f32.mxu0 0.0
        %v497 = vand.u32 %v143, 4294901760
        %498 = vmatmul.mubr.f32.gmra.mrb[0].mxu0 %v497
        %v499 = vpop.f32.mrb[0].mxu0
        %v500 = vadd.f32 %v331, %v499
        %v501 = vpop.f32.mrb[0].mxu0
        %502 = vdwg.mxu0
        %503 = vmatprep.subr.mxu0 0.0
        %v504 = vand.u32 %v197, 4294901760
        %v505 = vsub.f32 %v197, %v504
        %506 = vmatpush1.msra.mxu0 %v505
        %507 = vmatprep.subr.mxu0 0.0
        %v508 = vand.u32 %v198, 4294901760
        %v509 = vsub.f32 %v198, %v508
        %510 = vmatpush1.msra.mxu0 %v509
        %511 = vmatprep.subr.mxu0 0.0
        %v512 = vand.u32 %v199, 4294901760
        %v513 = vsub.f32 %v199, %v512
        %514 = vmatpush1.msra.mxu0 %v513
        %515 = vmatprep.subr.mxu0 0.0
        %v516 = vand.u32 %v200, 4294901760
        %v517 = vsub.f32 %v200, %v516
        %518 = vmatpush1.msra.mxu0 %v517
        %519 = vmatprep.subr.mxu0 0.0
        %v520 = vand.u32 %v201, 4294901760
        %v521 = vsub.f32 %v201, %v520
        %522 = vmatpush1.msra.mxu0 %v521
        %523 = vmatprep.subr.mxu0 0.0
        %v524 = vand.u32 %v202, 4294901760
        %v525 = vsub.f32 %v202, %v524
        %526 = vmatpush1.msra.mxu0 %v525
        %527 = vmatprep.subr.mxu0 0.0
        %v528 = vand.u32 %v203, 4294901760
        %v529 = vsub.f32 %v203, %v528
        %530 = vmatpush1.msra.mxu0 %v529
        %531 = vmatprep.subr.mxu0 0.0
        %v532 = vand.u32 %v204, 4294901760
        %v533 = vsub.f32 %v204, %v532
        %534 = vmatpush1.msra.mxu0 %v533
        %535 = vmatprep.subr.mxu0 0.0
        %v536 = vand.u32 %v205, 4294901760
        %v537 = vsub.f32 %v205, %v536
        %538 = vmatpush1.msra.mxu0 %v537
        %539 = vmatprep.subr.mxu0 0.0
        %v540 = vand.u32 %v206, 4294901760
        %v541 = vsub.f32 %v206, %v540
        %542 = vmatpush1.msra.mxu0 %v541
        %543 = vmatprep.subr.mxu0 0.0
        %v544 = vand.u32 %v207, 4294901760
        %v545 = vsub.f32 %v207, %v544
        %546 = vmatpush1.msra.mxu0 %v545
        %547 = vmatprep.subr.mxu0 0.0
        %v548 = vand.u32 %v208, 4294901760
        %v549 = vsub.f32 %v208, %v548
        %550 = vmatpush1.msra.mxu0 %v549
        %551 = vmatprep.subr.mxu0 0.0
        %v552 = vand.u32 %v209, 4294901760
        %v553 = vsub.f32 %v209, %v552
        %554 = vmatpush1.msra.mxu0 %v553
        %555 = vmatprep.subr.mxu0 0.0
        %v556 = vand.u32 %v210, 4294901760
        %v557 = vsub.f32 %v210, %v556
        %558 = vmatpush1.msra.mxu0 %v557
        %559 = vmatprep.subr.mxu0 0.0
        %v560 = vand.u32 %v211, 4294901760
        %v561 = vsub.f32 %v211, %v560
        %562 = vmatpush1.msra.mxu0 %v561
        %563 = vmatprep.subr.mxu0 0.0
        %v564 = vand.u32 %v212, 4294901760
        %v565 = vsub.f32 %v212, %v564
        %566 = vmatpush1.msra.mxu0 %v565
        %567 = vmatprep.subr.mxu0 0.0
        %568 = vmatpush1.msra.mxu0 0.0
        %569 = vmatprep.subr.mxu0 0.0
        %570 = vmatpush1.msra.mxu0 0.0
        %571 = vmatprep.subr.mxu0 0.0
        %572 = vmatpush1.msra.mxu0 0.0
        %573 = vmatprep.subr.mxu0 0.0
        %574 = vmatpush1.msra.mxu0 0.0
        %575 = vmatprep.subr.mxu0 0.0
        %576 = vmatpush1.msra.mxu0 0.0
        %577 = vmatprep.subr.mxu0 0.0
        %578 = vmatpush1.msra.mxu0 0.0
        %579 = vmatprep.subr.mxu0 0.0
        %580 = vmatpush1.msra.mxu0 0.0
        %581 = vmatprep.subr.mxu0 0.0
        %582 = vmatpush1.msra.mxu0 0.0
        %583 = vmatprep.subr.mxu0 0.0
        %584 = vmatpush1.msra.mxu0 0.0
        %585 = vmatprep.subr.mxu0 0.0
        %586 = vmatpush1.msra.mxu0 0.0
        %587 = vmatprep.subr.mxu0 0.0
        %588 = vmatpush1.msra.mxu0 0.0
        %589 = vmatprep.subr.mxu0 0.0
        %590 = vmatpush1.msra.mxu0 0.0
        %591 = vmatprep.subr.mxu0 0.0
        %592 = vmatpush1.msra.mxu0 0.0
        %593 = vmatprep.subr.mxu0 0.0
        %594 = vmatpush1.msra.mxu0 0.0
        %595 = vmatprep.subr.mxu0 0.0
        %596 = vmatpush1.msra.mxu0 0.0
        %597 = vmatprep.subr.mxu0 0.0
        %598 = vmatpush1.msra.mxu0 0.0
        %599 = vmatprep.mubr.f32.mxu0 0.0
        %v600 = vand.u32 %v140, 4294901760
        %v601 = vsub.f32 %v140, %v600
        %602 = vmatmul.mubr.f32.gmra.mrb[0].mxu0 %v601
        %v603 = vpop.f32.mrb[0].mxu0
        %v604 = vadd.f32 %v482, %v603
        %v605 = vpop.f32.mrb[0].mxu0
        %606 = vmatprep.mubr.f32.mxu0 0.0
        %v607 = vand.u32 %v141, 4294901760
        %v608 = vsub.f32 %v141, %v607
        %609 = vmatmul.mubr.f32.gmra.mrb[0].mxu0 %v608
        %v610 = vpop.f32.mrb[0].mxu0
        %v611 = vadd.f32 %v488, %v610
        %v612 = vpop.f32.mrb[0].mxu0
        %613 = vmatprep.mubr.f32.mxu0 0.0
        %v614 = vand.u32 %v142, 4294901760
        %v615 = vsub.f32 %v142, %v614
        %616 = vmatmul.mubr.f32.gmra.mrb[0].mxu0 %v615
        %v617 = vpop.f32.mrb[0].mxu0
        %v618 = vadd.f32 %v494, %v617
        %v619 = vpop.f32.mrb[0].mxu0
        %620 = vmatprep.mubr.f32.mxu0 0.0
        %v621 = vand.u32 %v143, 4294901760
        %v622 = vsub.f32 %v143, %v621
        %623 = vmatmul.mubr.f32.gmra.mrb[0].mxu0 %v622
        %v624 = vpop.f32.mrb[0].mxu0
        %v625 = vadd.f32 %v500, %v624
        %v626 = vpop.f32.mrb[0].mxu0
        %627 = vdwg.mxu0
        %628 = vmatprep.subr.mxu0 0.0
        %v629 = vand.u32 %v197, 4294901760
        %630 = vmatpush1.msra.mxu0 %v629
        %631 = vmatprep.subr.mxu0 0.0
        %v632 = vand.u32 %v198, 4294901760
        %633 = vmatpush1.msra.mxu0 %v632
        %634 = vmatprep.subr.mxu0 0.0
        %v635 = vand.u32 %v199, 4294901760
        %636 = vmatpush1.msra.mxu0 %v635
        %637 = vmatprep.subr.mxu0 0.0
        %v638 = vand.u32 %v200, 4294901760
        %639 = vmatpush1.msra.mxu0 %v638
        %640 = vmatprep.subr.mxu0 0.0
        %v641 = vand.u32 %v201, 4294901760
        %642 = vmatpush1.msra.mxu0 %v641
        %643 = vmatprep.subr.mxu0 0.0
        %v644 = vand.u32 %v202, 4294901760
        %645 = vmatpush1.msra.mxu0 %v644
        %646 = vmatprep.subr.mxu0 0.0
        %v647 = vand.u32 %v203, 4294901760
        %648 = vmatpush1.msra.mxu0 %v647
        %649 = vmatprep.subr.mxu0 0.0
        %v650 = vand.u32 %v204, 4294901760
        %651 = vmatpush1.msra.mxu0 %v650
        %652 = vmatprep.subr.mxu0 0.0
        %v653 = vand.u32 %v205, 4294901760
        %654 = vmatpush1.msra.mxu0 %v653
        %655 = vmatprep.subr.mxu0 0.0
        %v656 = vand.u32 %v206, 4294901760
        %657 = vmatpush1.msra.mxu0 %v656
        %658 = vmatprep.subr.mxu0 0.0
        %v659 = vand.u32 %v207, 4294901760
        %660 = vmatpush1.msra.mxu0 %v659
        %661 = vmatprep.subr.mxu0 0.0
        %v662 = vand.u32 %v208, 4294901760
        %663 = vmatpush1.msra.mxu0 %v662
        %664 = vmatprep.subr.mxu0 0.0
        %v665 = vand.u32 %v209, 4294901760
        %666 = vmatpush1.msra.mxu0 %v665
        %667 = vmatprep.subr.mxu0 0.0
        %v668 = vand.u32 %v210, 4294901760
        %669 = vmatpush1.msra.mxu0 %v668
        %670 = vmatprep.subr.mxu0 0.0
        %v671 = vand.u32 %v211, 4294901760
        %672 = vmatpush1.msra.mxu0 %v671
        %673 = vmatprep.subr.mxu0 0.0
        %v674 = vand.u32 %v212, 4294901760
        %675 = vmatpush1.msra.mxu0 %v674
        %676 = vmatprep.subr.mxu0 0.0
        %677 = vmatpush1.msra.mxu0 0.0
        %678 = vmatprep.subr.mxu0 0.0
        %679 = vmatpush1.msra.mxu0 0.0
        %680 = vmatprep.subr.mxu0 0.0
        %681 = vmatpush1.msra.mxu0 0.0
        %682 = vmatprep.subr.mxu0 0.0
        %683 = vmatpush1.msra.mxu0 0.0
        %684 = vmatprep.subr.mxu0 0.0
        %685 = vmatpush1.msra.mxu0 0.0
        %686 = vmatprep.subr.mxu0 0.0
        %687 = vmatpush1.msra.mxu0 0.0
        %688 = vmatprep.subr.mxu0 0.0
        %689 = vmatpush1.msra.mxu0 0.0
        %690 = vmatprep.subr.mxu0 0.0
        %691 = vmatpush1.msra.mxu0 0.0
        %692 = vmatprep.subr.mxu0 0.0
        %693 = vmatpush1.msra.mxu0 0.0
        %694 = vmatprep.subr.mxu0 0.0
        %695 = vmatpush1.msra.mxu0 0.0
        %696 = vmatprep.subr.mxu0 0.0
        %697 = vmatpush1.msra.mxu0 0.0
        %698 = vmatprep.subr.mxu0 0.0
        %699 = vmatpush1.msra.mxu0 0.0
        %700 = vmatprep.subr.mxu0 0.0
        %701 = vmatpush1.msra.mxu0 0.0
        %702 = vmatprep.subr.mxu0 0.0
        %703 = vmatpush1.msra.mxu0 0.0
        %704 = vmatprep.subr.mxu0 0.0
        %705 = vmatpush1.msra.mxu0 0.0
        %706 = vmatprep.subr.mxu0 0.0
        %707 = vmatpush1.msra.mxu0 0.0
        %708 = vmatprep.mubr.f32.mxu0 0.0
        %v709 = vand.u32 %v140, 4294901760
        %v710 = vsub.f32 %v140, %v709
        %v711 = vand.u32 %v710, 4294901760
        %712 = vmatmul.mubr.f32.gmra.mrb[0].mxu0 %v711
        %v713 = vpop.f32.mrb[0].mxu0
        %v714 = vadd.f32 %v604, %v713
        %v715 = vpop.f32.mrb[0].mxu0
        %716 = vmatprep.mubr.f32.mxu0 0.0
        %v717 = vand.u32 %v141, 4294901760
        %v718 = vsub.f32 %v141, %v717
        %v719 = vand.u32 %v718, 4294901760
        %720 = vmatmul.mubr.f32.gmra.mrb[0].mxu0 %v719
        %v721 = vpop.f32.mrb[0].mxu0
        %v722 = vadd.f32 %v611, %v721
        %v723 = vpop.f32.mrb[0].mxu0
        %724 = vmatprep.mubr.f32.mxu0 0.0
        %v725 = vand.u32 %v142, 4294901760
        %v726 = vsub.f32 %v142, %v725
        %v727 = vand.u32 %v726, 4294901760
        %728 = vmatmul.mubr.f32.gmra.mrb[0].mxu0 %v727
        %v729 = vpop.f32.mrb[0].mxu0
        %v730 = vadd.f32 %v618, %v729
        %v731 = vpop.f32.mrb[0].mxu0
        %732 = vmatprep.mubr.f32.mxu0 0.0
        %v733 = vand.u32 %v143, 4294901760
        %v734 = vsub.f32 %v143, %v733
        %v735 = vand.u32 %v734, 4294901760
        %736 = vmatmul.mubr.f32.gmra.mrb[0].mxu0 %v735
        %v737 = vpop.f32.mrb[0].mxu0
        %v738 = vadd.f32 %v625, %v737
        %v739 = vpop.f32.mrb[0].mxu0
        %740 = vdwg.mxu0
        %741 = vmatprep.subr.mxu0 0.0
        %v742 = vand.u32 %v197, 4294901760
        %v743 = vsub.f32 %v197, %v742
        %v744 = vand.u32 %v743, 4294901760
        %745 = vmatpush1.msra.mxu0 %v744
        %746 = vmatprep.subr.mxu0 0.0
        %v747 = vand.u32 %v198, 4294901760
        %v748 = vsub.f32 %v198, %v747
        %v749 = vand.u32 %v748, 4294901760
        %750 = vmatpush1.msra.mxu0 %v749
        %751 = vmatprep.subr.mxu0 0.0
        %v752 = vand.u32 %v199, 4294901760
        %v753 = vsub.f32 %v199, %v752
        %v754 = vand.u32 %v753, 4294901760
        %755 = vmatpush1.msra.mxu0 %v754
        %756 = vmatprep.subr.mxu0 0.0
        %v757 = vand.u32 %v200, 4294901760
        %v758 = vsub.f32 %v200, %v757
        %v759 = vand.u32 %v758, 4294901760
        %760 = vmatpush1.msra.mxu0 %v759
        %761 = vmatprep.subr.mxu0 0.0
        %v762 = vand.u32 %v201, 4294901760
        %v763 = vsub.f32 %v201, %v762
        %v764 = vand.u32 %v763, 4294901760
        %765 = vmatpush1.msra.mxu0 %v764
        %766 = vmatprep.subr.mxu0 0.0
        %v767 = vand.u32 %v202, 4294901760
        %v768 = vsub.f32 %v202, %v767
        %v769 = vand.u32 %v768, 4294901760
        %770 = vmatpush1.msra.mxu0 %v769
        %771 = vmatprep.subr.mxu0 0.0
        %v772 = vand.u32 %v203, 4294901760
        %v773 = vsub.f32 %v203, %v772
        %v774 = vand.u32 %v773, 4294901760
        %775 = vmatpush1.msra.mxu0 %v774
        %776 = vmatprep.subr.mxu0 0.0
        %v777 = vand.u32 %v204, 4294901760
        %v778 = vsub.f32 %v204, %v777
        %v779 = vand.u32 %v778, 4294901760
        %780 = vmatpush1.msra.mxu0 %v779
        %781 = vmatprep.subr.mxu0 0.0
        %v782 = vand.u32 %v205, 4294901760
        %v783 = vsub.f32 %v205, %v782
        %v784 = vand.u32 %v783, 4294901760
        %785 = vmatpush1.msra.mxu0 %v784
        %786 = vmatprep.subr.mxu0 0.0
        %v787 = vand.u32 %v206, 4294901760
        %v788 = vsub.f32 %v206, %v787
        %v789 = vand.u32 %v788, 4294901760
        %790 = vmatpush1.msra.mxu0 %v789
        %791 = vmatprep.subr.mxu0 0.0
        %v792 = vand.u32 %v207, 4294901760
        %v793 = vsub.f32 %v207, %v792
        %v794 = vand.u32 %v793, 4294901760
        %795 = vmatpush1.msra.mxu0 %v794
        %796 = vmatprep.subr.mxu0 0.0
        %v797 = vand.u32 %v208, 4294901760
        %v798 = vsub.f32 %v208, %v797
        %v799 = vand.u32 %v798, 4294901760
        %800 = vmatpush1.msra.mxu0 %v799
        %801 = vmatprep.subr.mxu0 0.0
        %v802 = vand.u32 %v209, 4294901760
        %v803 = vsub.f32 %v209, %v802
        %v804 = vand.u32 %v803, 4294901760
        %805 = vmatpush1.msra.mxu0 %v804
        %806 = vmatprep.subr.mxu0 0.0
        %v807 = vand.u32 %v210, 4294901760
        %v808 = vsub.f32 %v210, %v807
        %v809 = vand.u32 %v808, 4294901760
        %810 = vmatpush1.msra.mxu0 %v809
        %811 = vmatprep.subr.mxu0 0.0
        %v812 = vand.u32 %v211, 4294901760
        %v813 = vsub.f32 %v211, %v812
        %v814 = vand.u32 %v813, 4294901760
        %815 = vmatpush1.msra.mxu0 %v814
        %816 = vmatprep.subr.mxu0 0.0
        %v817 = vand.u32 %v212, 4294901760
        %v818 = vsub.f32 %v212, %v817
        %v819 = vand.u32 %v818, 4294901760
        %820 = vmatpush1.msra.mxu0 %v819
        %821 = vmatprep.subr.mxu0 0.0
        %822 = vmatpush1.msra.mxu0 0.0
        %823 = vmatprep.subr.mxu0 0.0
        %824 = vmatpush1.msra.mxu0 0.0
        %825 = vmatprep.subr.mxu0 0.0
        %826 = vmatpush1.msra.mxu0 0.0
        %827 = vmatprep.subr.mxu0 0.0
        %828 = vmatpush1.msra.mxu0 0.0
        %829 = vmatprep.subr.mxu0 0.0
        %830 = vmatpush1.msra.mxu0 0.0
        %831 = vmatprep.subr.mxu0 0.0
        %832 = vmatpush1.msra.mxu0 0.0
        %833 = vmatprep.subr.mxu0 0.0
        %834 = vmatpush1.msra.mxu0 0.0
        %835 = vmatprep.subr.mxu0 0.0
        %836 = vmatpush1.msra.mxu0 0.0
        %837 = vmatprep.subr.mxu0 0.0
        %838 = vmatpush1.msra.mxu0 0.0
        %839 = vmatprep.subr.mxu0 0.0
        %840 = vmatpush1.msra.mxu0 0.0
        %841 = vmatprep.subr.mxu0 0.0
        %842 = vmatpush1.msra.mxu0 0.0
        %843 = vmatprep.subr.mxu0 0.0
        %844 = vmatpush1.msra.mxu0 0.0
        %845 = vmatprep.subr.mxu0 0.0
        %846 = vmatpush1.msra.mxu0 0.0
        %847 = vmatprep.subr.mxu0 0.0
        %848 = vmatpush1.msra.mxu0 0.0
        %849 = vmatprep.subr.mxu0 0.0
        %850 = vmatpush1.msra.mxu0 0.0
        %851 = vmatprep.subr.mxu0 0.0
        %852 = vmatpush1.msra.mxu0 0.0
        %853 = vmatprep.mubr.f32.mxu0 0.0
        %v854 = vand.u32 %v140, 4294901760
        %855 = vmatmul.mubr.f32.gmra.mrb[0].mxu0 %v854
        %v856 = vpop.f32.mrb[0].mxu0
        %v857 = vadd.f32 %v714, %v856
        %v858 = vpop.f32.mrb[0].mxu0
        %859 = vmatprep.mubr.f32.mxu0 0.0
        %v860 = vand.u32 %v141, 4294901760
        %861 = vmatmul.mubr.f32.gmra.mrb[0].mxu0 %v860
        %v862 = vpop.f32.mrb[0].mxu0
        %v863 = vadd.f32 %v722, %v862
        %v864 = vpop.f32.mrb[0].mxu0
        %865 = vmatprep.mubr.f32.mxu0 0.0
        %v866 = vand.u32 %v142, 4294901760
        %867 = vmatmul.mubr.f32.gmra.mrb[0].mxu0 %v866
        %v868 = vpop.f32.mrb[0].mxu0
        %v869 = vadd.f32 %v730, %v868
        %v870 = vpop.f32.mrb[0].mxu0
        %871 = vmatprep.mubr.f32.mxu0 0.0
        %v872 = vand.u32 %v143, 4294901760
        %873 = vmatmul.mubr.f32.gmra.mrb[0].mxu0 %v872
        %v874 = vpop.f32.mrb[0].mxu0
        %v875 = vadd.f32 %v738, %v874
        %v876 = vpop.f32.mrb[0].mxu0
        %877 = vdwg.mxu0
        %878 = vmatprep.subr.mxu0 0.0
        %v879 = vand.u32 %v197, 4294901760
        %880 = vmatpush1.msra.mxu0 %v879
        %881 = vmatprep.subr.mxu0 0.0
        %v882 = vand.u32 %v198, 4294901760
        %883 = vmatpush1.msra.mxu0 %v882
        %884 = vmatprep.subr.mxu0 0.0
        %v885 = vand.u32 %v199, 4294901760
        %886 = vmatpush1.msra.mxu0 %v885
        %887 = vmatprep.subr.mxu0 0.0
        %v888 = vand.u32 %v200, 4294901760
        %889 = vmatpush1.msra.mxu0 %v888
        %890 = vmatprep.subr.mxu0 0.0
        %v891 = vand.u32 %v201, 4294901760
        %892 = vmatpush1.msra.mxu0 %v891
        %893 = vmatprep.subr.mxu0 0.0
        %v894 = vand.u32 %v202, 4294901760
        %895 = vmatpush1.msra.mxu0 %v894
        %896 = vmatprep.subr.mxu0 0.0
        %v897 = vand.u32 %v203, 4294901760
        %898 = vmatpush1.msra.mxu0 %v897
        %899 = vmatprep.subr.mxu0 0.0
        %v900 = vand.u32 %v204, 4294901760
        %901 = vmatpush1.msra.mxu0 %v900
        %902 = vmatprep.subr.mxu0 0.0
        %v903 = vand.u32 %v205, 4294901760
        %904 = vmatpush1.msra.mxu0 %v903
        %905 = vmatprep.subr.mxu0 0.0
        %v906 = vand.u32 %v206, 4294901760
        %907 = vmatpush1.msra.mxu0 %v906
        %908 = vmatprep.subr.mxu0 0.0
        %v909 = vand.u32 %v207, 4294901760
        %910 = vmatpush1.msra.mxu0 %v909
        %911 = vmatprep.subr.mxu0 0.0
        %v912 = vand.u32 %v208, 4294901760
        %913 = vmatpush1.msra.mxu0 %v912
        %914 = vmatprep.subr.mxu0 0.0
        %v915 = vand.u32 %v209, 4294901760
        %916 = vmatpush1.msra.mxu0 %v915
        %917 = vmatprep.subr.mxu0 0.0
        %v918 = vand.u32 %v210, 4294901760
        %919 = vmatpush1.msra.mxu0 %v918
        %920 = vmatprep.subr.mxu0 0.0
        %v921 = vand.u32 %v211, 4294901760
        %922 = vmatpush1.msra.mxu0 %v921
        %923 = vmatprep.subr.mxu0 0.0
        %v924 = vand.u32 %v212, 4294901760
        %925 = vmatpush1.msra.mxu0 %v924
        %926 = vmatprep.subr.mxu0 0.0
        %927 = vmatpush1.msra.mxu0 0.0
        %928 = vmatprep.subr.mxu0 0.0
        %929 = vmatpush1.msra.mxu0 0.0
        %930 = vmatprep.subr.mxu0 0.0
        %931 = vmatpush1.msra.mxu0 0.0
        %932 = vmatprep.subr.mxu0 0.0
        %933 = vmatpush1.msra.mxu0 0.0
        %934 = vmatprep.subr.mxu0 0.0
        %935 = vmatpush1.msra.mxu0 0.0
        %936 = vmatprep.subr.mxu0 0.0
        %937 = vmatpush1.msra.mxu0 0.0
        %938 = vmatprep.subr.mxu0 0.0
        %939 = vmatpush1.msra.mxu0 0.0
        %940 = vmatprep.subr.mxu0 0.0
        %941 = vmatpush1.msra.mxu0 0.0
        %942 = vmatprep.subr.mxu0 0.0
        %943 = vmatpush1.msra.mxu0 0.0
        %944 = vmatprep.subr.mxu0 0.0
        %945 = vmatpush1.msra.mxu0 0.0
        %946 = vmatprep.subr.mxu0 0.0
        %947 = vmatpush1.msra.mxu0 0.0
        %948 = vmatprep.subr.mxu0 0.0
        %949 = vmatpush1.msra.mxu0 0.0
        %950 = vmatprep.subr.mxu0 0.0
        %951 = vmatpush1.msra.mxu0 0.0
        %952 = vmatprep.subr.mxu0 0.0
        %953 = vmatpush1.msra.mxu0 0.0
        %954 = vmatprep.subr.mxu0 0.0
        %955 = vmatpush1.msra.mxu0 0.0
        %956 = vmatprep.subr.mxu0 0.0
        %957 = vmatpush1.msra.mxu0 0.0
        %958 = vmatprep.mubr.f32.mxu0 0.0
        %v959 = vand.u32 %v140, 4294901760
        %960 = vmatmul.mubr.f32.gmra.mrb[0].mxu0 %v959
        %v961 = vpop.f32.mrb[0].mxu0
        %v962 = vadd.f32 %v857, %v961
        %v963 = vpop.f32.mrb[0].mxu0
        %964 = vmatprep.mubr.f32.mxu0 0.0
        %v965 = vand.u32 %v141, 4294901760
        %966 = vmatmul.mubr.f32.gmra.mrb[0].mxu0 %v965
        %v967 = vpop.f32.mrb[0].mxu0
        %v968 = vadd.f32 %v863, %v967
        %v969 = vpop.f32.mrb[0].mxu0
        %970 = vmatprep.mubr.f32.mxu0 0.0
        %v971 = vand.u32 %v142, 4294901760
        %972 = vmatmul.mubr.f32.gmra.mrb[0].mxu0 %v971
        %v973 = vpop.f32.mrb[0].mxu0
        %v974 = vadd.f32 %v869, %v973
        %v975 = vpop.f32.mrb[0].mxu0
        %976 = vmatprep.mubr.f32.mxu0 0.0
        %v977 = vand.u32 %v143, 4294901760
        %978 = vmatmul.mubr.f32.gmra.mrb[0].mxu0 %v977
        %v979 = vpop.f32.mrb[0].mxu0
        %v980 = vadd.f32 %v875, %v979
        %v981 = vpop.f32.mrb[0].mxu0
        %982 = vdwg.mxu0
        %vm983 = vcmask 261120
        %984 = vst.msk [vmem:[%s138] sm:$0xff] %vm983, %v962
        %985 = vst.msk [vmem:[%s138 + $0x8] sm:$0xff] %vm983, %v968
        %986 = vst.msk [vmem:[%s138 + $0x10] sm:$0xff] %vm983, %v974
        %987 = vst.msk [vmem:[%s138 + $0x18] sm:$0xff] %vm983, %v980
        %s988 = smul.u32 4, %s15
        %p989 = scmp.lt.s32.totalorder %s988, 7
        %s990 = scalar_select %p989, %s988, 7
        %s991 = smul.addr %s990, 8
        %s992 = scalar_lea.vmem %s1, %s991
        // Predicated region
        $region29: #{tpu_custom_call.1} parent=23 // pred_check
          %p993 = pneg %p59
        $region30: #{tpu_custom_call.1} parent=23 // pred_check_branch
          %995 = sbr.rel (%p993) target = $region32
        $region31: #{tpu_custom_call.1} parent=23 // pred_region
          %s996 = smul.u32 4, %s15
        $region32: #{tpu_custom_call.1} parent=23 // pred_fallthru
          _
      $region24: #{tpu_custom_call.1} parent=5 // pred_fallthru
        _
      %p997 = scmp.le.s32.totalorder 2, %s10
      // Predicated region
      $region33: #{tpu_custom_call.1} parent=5 // pred_check
        %p998 = pneg %p997
      $region34: #{tpu_custom_call.1} parent=5 // pred_check_branch
        %1000 = sbr.rel (%p998) target = $region36
      $region35: #{tpu_custom_call.1} parent=5 // pred_region
        %s1001 = ssub.s32 %s10, 2
        // Predicated region
        $region37: #{tpu_custom_call.1} parent=35 // pred_check
          %p1002 = pneg %p65
        $region38: #{tpu_custom_call.1} parent=35 // pred_check_branch
          %1004 = sbr.rel (%p1002) target = $region40
        $region39: #{tpu_custom_call.1} parent=35 // pred_region
          %s1005 = smul.u32 4, %s16
          %p1006 = scmp.lt.s32.totalorder %s1005, 7
          %s1007 = scalar_select %p1006, %s1005, 7
          %s1008 = smul.addr %s1007, 8
          %s1009 = scalar_lea.vmem %s1, %s1008
        $region40: #{tpu_custom_call.1} parent=35 // pred_fallthru
          _
      $region36: #{tpu_custom_call.1} parent=5 // pred_fallthru
        _
    $region6: #{tpu_custom_call.1} parent=1 // loop_footer
      %s14 = sadd.s32 1, %s10
    $region7: #{tpu_custom_call.1} parent=1 // loop_footer_branch
      %9 = sbr.rel target = $region3
    $region8: #{tpu_custom_call.1} parent=1 // loop_exit
      _
    %1010 = vsyncpa [#allocation3], 1
    %s1011 = scalar_lea.sflag [#allocation3], 1
    %1012 = vsyncpa %s1011, 1

</llo_original>
